<compile_context>
chip_gen: v7x
topology: tpu7x:2x2x1
jax: 0.10.0
libtpu: 0.0.40
codegen_flags: <defaults>
</compile_context>

<pallas_src>
import functools

import jax
import jax.numpy as jnp
import numpy as np
from jax.experimental import pallas as pl
from jax.experimental.pallas import tpu as pltpu


# ----------------------------------------------------------------------------
# Fused forward kernel (one batch tile of `bt` examples per grid step)
# ----------------------------------------------------------------------------
def _convnet_kernel(x_ref, w1t_ref, b1_ref, w2t_ref, b2_ref,
                    wf1_ref, bf1_ref, wf2_ref, bf2_ref, wf3_ref, bf3_ref,
                    out_ref, *, bt):
    f32 = jnp.float32
    bf16 = jnp.bfloat16

    # ---- conv1 + ReLU + MaxPool(2,2) as ONE MXU matmul ----------------------
    # x_ref[b, g, t, ix*3+c] = input[b, 4t+g, ix, c]  (rows grouped by row%4).
    # lhs row a (parity P) holds the 6 input rows {2k+s, s=0..5} (k = 2a or
    # 2a+1) flattened over (s, ix, c) -> 576 lanes; the Toeplitz rhs w1t maps
    # them to the 4 pool quadrants x (14 pooled cols x 6 channels) = 336 lanes.
    lhs_even, lhs_odd = [], []
    for b in range(bt):
        xb = x_ref[b]                                    # (4, 8, 96) f32
        g0, g1, g2, g3 = xb[0], xb[1], xb[2], xb[3]      # (8, 96) each
        lhs_even.append(jnp.concatenate(                 # pooled rows k = 0,2,..,12
            [g0[0:7], g1[0:7], g2[0:7], g3[0:7], g0[1:8], g1[1:8]], axis=-1))
        lhs_odd.append(jnp.concatenate(                  # pooled rows k = 1,3,..,13
            [g2[0:7], g3[0:7], g0[1:8], g1[1:8], g2[1:8], g3[1:8]], axis=-1))
    lhs1 = jnp.concatenate(lhs_even + lhs_odd, axis=0)   # (bt*14, 576) f32
    y1 = jnp.dot(lhs1.astype(bf16), w1t_ref[...],
                 preferred_element_type=f32)             # (bt*14, 336)
    q1 = jnp.maximum(jnp.maximum(y1[:, 0:84], y1[:, 84:168]),
                     jnp.maximum(y1[:, 168:252], y1[:, 252:336]))
    p1 = jnp.maximum(q1 + b1_ref[...], 0.0)              # (bt*14, 84) f32
    # lanes of p1: j*6 + m  (j = pooled col 0..13, m = channel 0..5)

    # ---- conv2 + ReLU + MaxPool(2,2) as ONE MXU matmul ----------------------
    lhs2 = []
    for b in range(bt):
        pe = p1[b * 7:(b + 1) * 7]                       # even pooled rows (7, 84)
        po = p1[(bt + b) * 7:(bt + b + 1) * 7]           # odd  pooled rows (7, 84)
        lhs2.append(jnp.concatenate(                     # rows 2k2+s2, s2 = 0..5
            [pe[0:5], po[0:5], pe[1:6], po[1:6], pe[2:7], po[2:7]], axis=-1))
    lhs2 = jnp.concatenate(lhs2, axis=0)                 # (bt*5, 504) f32
    y2 = jnp.dot(lhs2.astype(bf16), w2t_ref[...],
                 preferred_element_type=f32)             # (bt*5, 320)
    q2 = jnp.maximum(jnp.maximum(y2[:, 0:80], y2[:, 80:160]),
                     jnp.maximum(y2[:, 160:240], y2[:, 240:320]))
    p2 = jnp.maximum(q2 + b2_ref[...], 0.0)              # (bt*5, 80) f32
    # lanes of p2: j2*16 + n  (j2 = pooled col 0..4, n = channel 0..15)

    # ---- flatten (PyTorch NCHW order absorbed into wf1) ---------------------
    feats = []
    for b in range(bt):
        pb = p2[b * 5:(b + 1) * 5]                       # (5, 80)
        feats.append(jnp.concatenate(
            [pb[0:1], pb[1:2], pb[2:3], pb[3:4], pb[4:5]], axis=-1))  # (1, 400)
    feat = jnp.concatenate(feats, axis=0)                # (bt, 400) f32

    # ---- fc1 (single K=400 matmul) / fc2 / fc3 ------------------------------
    z1 = jnp.dot(feat.astype(bf16), wf1_ref[...],
                 preferred_element_type=f32) + bf1_ref[...]
    z1 = jnp.maximum(z1, 0.0)
    z2 = jnp.dot(z1.astype(bf16), wf2_ref[...],
                 preferred_element_type=f32) + bf2_ref[...]
    z2 = jnp.maximum(z2, 0.0)
    z3 = jnp.dot(z2.astype(bf16), wf3_ref[...],
                 preferred_element_type=f32) + bf3_ref[...]
    out_ref[...] = z3.astype(out_ref.dtype)              # (bt, 128) lane-dense


# ----------------------------------------------------------------------------
# One-time parameter re-layout (outside jit): banded conv matrices, bf16 cast
# ----------------------------------------------------------------------------
def prepare_params(p):
    hidden = p["fc1_w"].shape[0]
    w1 = np.asarray(p["conv1_w"], np.float32)            # (6, 3, 5, 5)  OIHW
    w2 = np.asarray(p["conv2_w"], np.float32)            # (16, 6, 5, 5)

    # conv1 + pool1: lhs lanes s*96 + ix*3 + c ; out cols (2u+v)*84 + j*6 + m
    w1t = np.zeros((576, 336), np.float32)
    for u in range(2):
        for v in range(2):
            for dy in range(5):
                s = u + dy
                for dx in range(5):
                    blk = w1[:, :, dy, dx].T              # (c, m)
                    for j in range(14):
                        ix = 2 * j + v + dx
                        r0, c0 = s * 96 + ix * 3, (2 * u + v) * 84 + j * 6
                        w1t[r0:r0 + 3, c0:c0 + 6] = blk

    # conv2 + pool2: lhs lanes s2*84 + j*6 + m ; out cols (2u+v)*80 + j2*16 + n
    w2t = np.zeros((504, 320), np.float32)
    for u in range(2):
        for v in range(2):
            for dy in range(5):
                s2 = u + dy
                for dx in range(5):
                    blk = w2[:, :, dy, dx].T              # (m, n)
                    for j2 in range(5):
                        j = 2 * j2 + v + dx
                        r0, c0 = s2 * 84 + j * 6, (2 * u + v) * 80 + j2 * 16
                        w2t[r0:r0 + 6, c0:c0 + 16] = blk

    # fc1: kernel feature lane order is k2*80 + j2*16 + n; PyTorch flatten
    # order is n*25 + k2*5 + j2 -> absorb the permutation into the weight.
    wf1 = np.asarray(p["fc1_w"], np.float32).reshape(hidden, 16, 5, 5)
    wf1 = np.transpose(wf1, (2, 3, 1, 0)).reshape(400, hidden)

    wf2 = np.asarray(p["fc2_w"], np.float32).T            # (hidden, 84)
    wf3 = np.zeros((84, 128), np.float32)                  # 10 -> 128 lane pad
    wf3[:, :10] = np.asarray(p["fc3_w"], np.float32).T
    bf3 = np.zeros((1, 128), np.float32)
    bf3[0, :10] = np.asarray(p["fc3_b"], np.float32)

    b1 = np.tile(np.asarray(p["conv1_b"], np.float32), 14).reshape(1, 84)
    b2 = np.tile(np.asarray(p["conv2_b"], np.float32), 5).reshape(1, 80)

    return dict(
        w1t=jnp.asarray(w1t, jnp.bfloat16), b1=jnp.asarray(b1),
        w2t=jnp.asarray(w2t, jnp.bfloat16), b2=jnp.asarray(b2),
        wf1=jnp.asarray(wf1, jnp.bfloat16),
        bf1=jnp.asarray(np.asarray(p["fc1_b"], np.float32).reshape(1, hidden)),
        wf2=jnp.asarray(wf2, jnp.bfloat16),
        bf2=jnp.asarray(np.asarray(p["fc2_b"], np.float32).reshape(1, 84)),
        wf3=jnp.asarray(wf3, jnp.bfloat16), bf3=jnp.asarray(bf3),
    )


@jax.jit
def forward(x, prep):
    """x: (B, 3, 32, 32) NCHW (PyTorch convention)."""
    B = x.shape[0]
    # NCHW -> (B, 32, W*C=96), then group rows by (row mod 4) so every
    # pooling-parity row slice inside the kernel is a unit-stride slice.
    xh = jnp.transpose(x, (0, 2, 3, 1)).reshape(B, 32, 96)
    x4 = jnp.transpose(xh.reshape(B, 8, 4, 96), (0, 2, 1, 3))   # (B, 4, 8, 96)

    bt = 8 if B >= 8 else B                       # batch tile per grid step
    b_pad = ((B + bt - 1) // bt) * bt
    if b_pad != B:
        x4 = jnp.pad(x4, ((0, b_pad - B), (0, 0), (0, 0), (0, 0)))

    weights = (prep["w1t"], prep["b1"], prep["w2t"], prep["b2"],
               prep["wf1"], prep["bf1"], prep["wf2"], prep["bf2"],
               prep["wf3"], prep["bf3"])
    # Weights: full-array blocks, constant index_map -> stay VMEM-resident.
    w_specs = [pl.BlockSpec(w.shape, lambda i: (0, 0)) for w in weights]

    out = pl.pallas_call(
        functools.partial(_convnet_kernel, bt=bt),
        out_shape=jax.ShapeDtypeStruct((b_pad, 128), jnp.float32),
        grid=(b_pad // bt,),
        in_specs=[pl.BlockSpec((bt, 4, 8, 96), lambda i: (i, 0, 0, 0))] + w_specs,
        out_specs=pl.BlockSpec((bt, 128), lambda i: (i, 0)),
        compiler_params=pltpu.CompilerParams(
            dimension_semantics=("parallel",)),
    )(x4, *weights)
    return out[:B, :10]


# ----------------------------------------------------------------------------
# Init + pure-JAX reference (correctness check only)
# ----------------------------------------------------------------------------
def init_params(key, hidden=128):
    ks = jax.random.split(key, 10)
    scale = 0.1
    return dict(
        conv1_w=scale * jax.random.normal(ks[0], (6, 3, 5, 5), jnp.float32),
        conv1_b=scale * jax.random.normal(ks[1], (6,), jnp.float32),
        conv2_w=scale * jax.random.normal(ks[2], (16, 6, 5, 5), jnp.float32),
        conv2_b=scale * jax.random.normal(ks[3], (16,), jnp.float32),
        fc1_w=scale * jax.random.normal(ks[4], (hidden, 16 * 5 * 5), jnp.float32),
        fc1_b=scale * jax.random.normal(ks[5], (hidden,), jnp.float32),
        fc2_w=scale * jax.random.normal(ks[6], (84, hidden), jnp.float32),
        fc2_b=scale * jax.random.normal(ks[7], (84,), jnp.float32),
        fc3_w=scale * jax.random.normal(ks[8], (10, 84), jnp.float32),
        fc3_b=scale * jax.random.normal(ks[9], (10,), jnp.float32),
    )


def ref_forward(x, p):
    def conv(x, w, b):
        y = jax.lax.conv_general_dilated(
            x, w, window_strides=(1, 1), padding="VALID",
            dimension_numbers=("NCHW", "OIHW", "NCHW"))
        return jnp.maximum(y + b[None, :, None, None], 0.0)

    def pool(y):
        return jax.lax.reduce_window(
            y, -jnp.inf, jax.lax.max, (1, 1, 2, 2), (1, 1, 2, 2), "VALID")

    x = pool(conv(x, p["conv1_w"], p["conv1_b"]))
    x = pool(conv(x, p["conv2_w"], p["conv2_b"]))
    x = x.reshape(-1, 16 * 5 * 5)
    x = jnp.maximum(x @ p["fc1_w"].T + p["fc1_b"], 0.0)
    x = jnp.maximum(x @ p["fc2_w"].T + p["fc2_b"], 0.0)
    x = x @ p["fc3_w"].T + p["fc3_b"]
    return x


if __name__ == "__main__":
    key = jax.random.PRNGKey(0)
    kx, kp = jax.random.split(key)

    B, HIDDEN = 2, 128
    # 32x32 input: 32 -conv5-> 28 -pool-> 14 -conv5-> 10 -pool-> 5
    x = jax.random.normal(kx, (B, 3, 32, 32), jnp.float32)
    params = init_params(kp, hidden=HIDDEN)
    prep = prepare_params(params)     # one-time weight re-layout / bf16 cast

    out = jax.block_until_ready(forward(x, prep))
    assert out.shape == (B, 10), out.shape

    ref = jax.block_until_ready(ref_forward(x, params))
    # MXU operands are bf16 (f32 accumulation); elementwise math is f32.
    np.testing.assert_allclose(np.asarray(out), np.asarray(ref), rtol=5e-2, atol=5e-2)

    print("KERNEL_OK")
</pallas_src>

<mosaic_0001>
module attributes {stable_mosaic.version = 11 : i64} {
  func.func @_convnet_kernel(%arg0: i32, %arg1: memref<2x4x8x96xf32, #tpu.memory_space<vmem>>, %arg2: memref<576x336xbf16, #tpu.memory_space<vmem>>, %arg3: memref<1x84xf32, #tpu.memory_space<vmem>>, %arg4: memref<504x320xbf16, #tpu.memory_space<vmem>>, %arg5: memref<1x80xf32, #tpu.memory_space<vmem>>, %arg6: memref<400x128xbf16, #tpu.memory_space<vmem>>, %arg7: memref<1x128xf32, #tpu.memory_space<vmem>>, %arg8: memref<128x84xbf16, #tpu.memory_space<vmem>>, %arg9: memref<1x84xf32, #tpu.memory_space<vmem>>, %arg10: memref<84x128xbf16, #tpu.memory_space<vmem>>, %arg11: memref<1x128xf32, #tpu.memory_space<vmem>>, %arg12: memref<2x128xf32, #tpu.memory_space<vmem>>) attributes {dimension_semantics = [#tpu.dimension_semantics<parallel>], iteration_bounds = array<i64: 1>, scalar_prefetch = 0 : i64, scratch_operands = 0 : i64, tpu.core_type = #tpu.core_type<tc>, window_params = [{transform_indices = @transform_0, window_bounds = array<i64: 2, 4, 8, 96>}, {pipeline_mode = #tpu.pipeline_mode<synchronous>, transform_indices = @transform_1, window_bounds = array<i64: 576, 336>}, {pipeline_mode = #tpu.pipeline_mode<synchronous>, transform_indices = @transform_2, window_bounds = array<i64: 1, 84>}, {pipeline_mode = #tpu.pipeline_mode<synchronous>, transform_indices = @transform_3, window_bounds = array<i64: 504, 320>}, {pipeline_mode = #tpu.pipeline_mode<synchronous>, transform_indices = @transform_4, window_bounds = array<i64: 1, 80>}, {pipeline_mode = #tpu.pipeline_mode<synchronous>, transform_indices = @transform_5, window_bounds = array<i64: 400, 128>}, {pipeline_mode = #tpu.pipeline_mode<synchronous>, transform_indices = @transform_6, window_bounds = array<i64: 1, 128>}, {pipeline_mode = #tpu.pipeline_mode<synchronous>, transform_indices = @transform_7, window_bounds = array<i64: 128, 84>}, {pipeline_mode = #tpu.pipeline_mode<synchronous>, transform_indices = @transform_8, window_bounds = array<i64: 1, 84>}, {pipeline_mode = #tpu.pipeline_mode<synchronous>, transform_indices = @transform_9, window_bounds = array<i64: 84, 128>}, {pipeline_mode = #tpu.pipeline_mode<synchronous>, transform_indices = @transform_10, window_bounds = array<i64: 1, 128>}, {transform_indices = @transform_11, window_bounds = array<i64: 2, 128>}]} {
    %c0 = arith.constant 0 : index
    %c0_0 = arith.constant 0 : index
    %c0_1 = arith.constant 0 : index
    %c0_2 = arith.constant 0 : index
    %0 = vector.load %arg1[%c0, %c0_0, %c0_1, %c0_2] : memref<2x4x8x96xf32, #tpu.memory_space<vmem>>, vector<1x4x8x96xf32>
    %1 = vector.shape_cast %0 : vector<1x4x8x96xf32> to vector<4x8x96xf32>
    %2 = vector.extract_strided_slice %1 {offsets = [0, 0, 0], sizes = [1, 8, 96], strides = [1, 1, 1]} : vector<4x8x96xf32> to vector<1x8x96xf32>
    %3 = vector.shape_cast %2 : vector<1x8x96xf32> to vector<8x96xf32>
    %4 = vector.extract_strided_slice %1 {offsets = [1, 0, 0], sizes = [1, 8, 96], strides = [1, 1, 1]} : vector<4x8x96xf32> to vector<1x8x96xf32>
    %5 = vector.shape_cast %4 : vector<1x8x96xf32> to vector<8x96xf32>
    %6 = vector.extract_strided_slice %1 {offsets = [2, 0, 0], sizes = [1, 8, 96], strides = [1, 1, 1]} : vector<4x8x96xf32> to vector<1x8x96xf32>
    %7 = vector.shape_cast %6 : vector<1x8x96xf32> to vector<8x96xf32>
    %8 = vector.extract_strided_slice %1 {offsets = [3, 0, 0], sizes = [1, 8, 96], strides = [1, 1, 1]} : vector<4x8x96xf32> to vector<1x8x96xf32>
    %9 = vector.shape_cast %8 : vector<1x8x96xf32> to vector<8x96xf32>
    %10 = vector.extract_strided_slice %3 {offsets = [0, 0], sizes = [7, 96], strides = [1, 1]} : vector<8x96xf32> to vector<7x96xf32>
    %11 = vector.extract_strided_slice %5 {offsets = [0, 0], sizes = [7, 96], strides = [1, 1]} : vector<8x96xf32> to vector<7x96xf32>
    %12 = vector.extract_strided_slice %7 {offsets = [0, 0], sizes = [7, 96], strides = [1, 1]} : vector<8x96xf32> to vector<7x96xf32>
    %13 = vector.extract_strided_slice %9 {offsets = [0, 0], sizes = [7, 96], strides = [1, 1]} : vector<8x96xf32> to vector<7x96xf32>
    %14 = vector.extract_strided_slice %3 {offsets = [1, 0], sizes = [7, 96], strides = [1, 1]} : vector<8x96xf32> to vector<7x96xf32>
    %15 = vector.extract_strided_slice %5 {offsets = [1, 0], sizes = [7, 96], strides = [1, 1]} : vector<8x96xf32> to vector<7x96xf32>
    %16 = tpu.concatenate %10, %11, %12, %13, %14, %15 in 1 : vector<7x96xf32>, vector<7x96xf32>, vector<7x96xf32>, vector<7x96xf32>, vector<7x96xf32>, vector<7x96xf32> -> vector<7x576xf32>
    %17 = vector.extract_strided_slice %7 {offsets = [0, 0], sizes = [7, 96], strides = [1, 1]} : vector<8x96xf32> to vector<7x96xf32>
    %18 = vector.extract_strided_slice %9 {offsets = [0, 0], sizes = [7, 96], strides = [1, 1]} : vector<8x96xf32> to vector<7x96xf32>
    %19 = vector.extract_strided_slice %3 {offsets = [1, 0], sizes = [7, 96], strides = [1, 1]} : vector<8x96xf32> to vector<7x96xf32>
    %20 = vector.extract_strided_slice %5 {offsets = [1, 0], sizes = [7, 96], strides = [1, 1]} : vector<8x96xf32> to vector<7x96xf32>
    %21 = vector.extract_strided_slice %7 {offsets = [1, 0], sizes = [7, 96], strides = [1, 1]} : vector<8x96xf32> to vector<7x96xf32>
    %22 = vector.extract_strided_slice %9 {offsets = [1, 0], sizes = [7, 96], strides = [1, 1]} : vector<8x96xf32> to vector<7x96xf32>
    %23 = tpu.concatenate %17, %18, %19, %20, %21, %22 in 1 : vector<7x96xf32>, vector<7x96xf32>, vector<7x96xf32>, vector<7x96xf32>, vector<7x96xf32>, vector<7x96xf32> -> vector<7x576xf32>
    %c1 = arith.constant 1 : index
    %c0_3 = arith.constant 0 : index
    %c0_4 = arith.constant 0 : index
    %c0_5 = arith.constant 0 : index
    %24 = vector.load %arg1[%c1, %c0_3, %c0_4, %c0_5] : memref<2x4x8x96xf32, #tpu.memory_space<vmem>>, vector<1x4x8x96xf32>
    %25 = vector.shape_cast %24 : vector<1x4x8x96xf32> to vector<4x8x96xf32>
    %26 = vector.extract_strided_slice %25 {offsets = [0, 0, 0], sizes = [1, 8, 96], strides = [1, 1, 1]} : vector<4x8x96xf32> to vector<1x8x96xf32>
    %27 = vector.shape_cast %26 : vector<1x8x96xf32> to vector<8x96xf32>
    %28 = vector.extract_strided_slice %25 {offsets = [1, 0, 0], sizes = [1, 8, 96], strides = [1, 1, 1]} : vector<4x8x96xf32> to vector<1x8x96xf32>
    %29 = vector.shape_cast %28 : vector<1x8x96xf32> to vector<8x96xf32>
    %30 = vector.extract_strided_slice %25 {offsets = [2, 0, 0], sizes = [1, 8, 96], strides = [1, 1, 1]} : vector<4x8x96xf32> to vector<1x8x96xf32>
    %31 = vector.shape_cast %30 : vector<1x8x96xf32> to vector<8x96xf32>
    %32 = vector.extract_strided_slice %25 {offsets = [3, 0, 0], sizes = [1, 8, 96], strides = [1, 1, 1]} : vector<4x8x96xf32> to vector<1x8x96xf32>
    %33 = vector.shape_cast %32 : vector<1x8x96xf32> to vector<8x96xf32>
    %34 = vector.extract_strided_slice %27 {offsets = [0, 0], sizes = [7, 96], strides = [1, 1]} : vector<8x96xf32> to vector<7x96xf32>
    %35 = vector.extract_strided_slice %29 {offsets = [0, 0], sizes = [7, 96], strides = [1, 1]} : vector<8x96xf32> to vector<7x96xf32>
    %36 = vector.extract_strided_slice %31 {offsets = [0, 0], sizes = [7, 96], strides = [1, 1]} : vector<8x96xf32> to vector<7x96xf32>
    %37 = vector.extract_strided_slice %33 {offsets = [0, 0], sizes = [7, 96], strides = [1, 1]} : vector<8x96xf32> to vector<7x96xf32>
    %38 = vector.extract_strided_slice %27 {offsets = [1, 0], sizes = [7, 96], strides = [1, 1]} : vector<8x96xf32> to vector<7x96xf32>
    %39 = vector.extract_strided_slice %29 {offsets = [1, 0], sizes = [7, 96], strides = [1, 1]} : vector<8x96xf32> to vector<7x96xf32>
    %40 = tpu.concatenate %34, %35, %36, %37, %38, %39 in 1 : vector<7x96xf32>, vector<7x96xf32>, vector<7x96xf32>, vector<7x96xf32>, vector<7x96xf32>, vector<7x96xf32> -> vector<7x576xf32>
    %41 = vector.extract_strided_slice %31 {offsets = [0, 0], sizes = [7, 96], strides = [1, 1]} : vector<8x96xf32> to vector<7x96xf32>
    %42 = vector.extract_strided_slice %33 {offsets = [0, 0], sizes = [7, 96], strides = [1, 1]} : vector<8x96xf32> to vector<7x96xf32>
    %43 = vector.extract_strided_slice %27 {offsets = [1, 0], sizes = [7, 96], strides = [1, 1]} : vector<8x96xf32> to vector<7x96xf32>
    %44 = vector.extract_strided_slice %29 {offsets = [1, 0], sizes = [7, 96], strides = [1, 1]} : vector<8x96xf32> to vector<7x96xf32>
    %45 = vector.extract_strided_slice %31 {offsets = [1, 0], sizes = [7, 96], strides = [1, 1]} : vector<8x96xf32> to vector<7x96xf32>
    %46 = vector.extract_strided_slice %33 {offsets = [1, 0], sizes = [7, 96], strides = [1, 1]} : vector<8x96xf32> to vector<7x96xf32>
    %47 = tpu.concatenate %41, %42, %43, %44, %45, %46 in 1 : vector<7x96xf32>, vector<7x96xf32>, vector<7x96xf32>, vector<7x96xf32>, vector<7x96xf32>, vector<7x96xf32> -> vector<7x576xf32>
    %48 = tpu.concatenate %16, %40, %23, %47 in 0 : vector<7x576xf32>, vector<7x576xf32>, vector<7x576xf32>, vector<7x576xf32> -> vector<28x576xf32>
    %49 = arith.truncf %48 : vector<28x576xf32> to vector<28x576xbf16>
    %c0_6 = arith.constant 0 : index
    %c0_7 = arith.constant 0 : index
    %50 = vector.load %arg2[%c0_6, %c0_7] : memref<576x336xbf16, #tpu.memory_space<vmem>>, vector<576x336xbf16>
    %cst = arith.constant dense<0.000000e+00> : vector<28x336xf32>
    %51 = tpu.matmul %49, %50, %cst {dimension_numbers = #tpu.dot_dimension_numbers<[1], [0], [0], [1], [0, 0, 1, 1], [], []>} : vector<28x576xbf16>, vector<576x336xbf16>, vector<28x336xf32> -> vector<28x336xf32>
    %52 = vector.extract_strided_slice %51 {offsets = [0, 0], sizes = [28, 84], strides = [1, 1]} : vector<28x336xf32> to vector<28x84xf32>
    %53 = vector.extract_strided_slice %51 {offsets = [0, 84], sizes = [28, 84], strides = [1, 1]} : vector<28x336xf32> to vector<28x84xf32>
    %54 = arith.maximumf %52, %53 : vector<28x84xf32>
    %55 = vector.extract_strided_slice %51 {offsets = [0, 168], sizes = [28, 84], strides = [1, 1]} : vector<28x336xf32> to vector<28x84xf32>
    %56 = vector.extract_strided_slice %51 {offsets = [0, 252], sizes = [28, 84], strides = [1, 1]} : vector<28x336xf32> to vector<28x84xf32>
    %57 = arith.maximumf %55, %56 : vector<28x84xf32>
    %58 = arith.maximumf %54, %57 : vector<28x84xf32>
    %c0_8 = arith.constant 0 : index
    %c0_9 = arith.constant 0 : index
    %59 = vector.load %arg3[%c0_8, %c0_9] : memref<1x84xf32, #tpu.memory_space<vmem>>, vector<1x84xf32>
    %60 = vector.broadcast %59 : vector<1x84xf32> to vector<28x84xf32>
    %61 = arith.addf %58, %60 : vector<28x84xf32>
    %cst_10 = arith.constant 0.000000e+00 : f32
    %62 = vector.broadcast %cst_10 : f32 to vector<28x84xf32>
    %63 = arith.maximumf %61, %62 : vector<28x84xf32>
    %64 = vector.extract_strided_slice %63 {offsets = [0, 0], sizes = [7, 84], strides = [1, 1]} : vector<28x84xf32> to vector<7x84xf32>
    %65 = vector.extract_strided_slice %63 {offsets = [14, 0], sizes = [7, 84], strides = [1, 1]} : vector<28x84xf32> to vector<7x84xf32>
    %66 = vector.extract_strided_slice %64 {offsets = [0, 0], sizes = [5, 84], strides = [1, 1]} : vector<7x84xf32> to vector<5x84xf32>
    %67 = vector.extract_strided_slice %65 {offsets = [0, 0], sizes = [5, 84], strides = [1, 1]} : vector<7x84xf32> to vector<5x84xf32>
    %68 = vector.extract_strided_slice %64 {offsets = [1, 0], sizes = [5, 84], strides = [1, 1]} : vector<7x84xf32> to vector<5x84xf32>
    %69 = vector.extract_strided_slice %65 {offsets = [1, 0], sizes = [5, 84], strides = [1, 1]} : vector<7x84xf32> to vector<5x84xf32>
    %70 = vector.extract_strided_slice %64 {offsets = [2, 0], sizes = [5, 84], strides = [1, 1]} : vector<7x84xf32> to vector<5x84xf32>
    %71 = vector.extract_strided_slice %65 {offsets = [2, 0], sizes = [5, 84], strides = [1, 1]} : vector<7x84xf32> to vector<5x84xf32>
    %72 = tpu.concatenate %66, %67, %68, %69, %70, %71 in 1 : vector<5x84xf32>, vector<5x84xf32>, vector<5x84xf32>, vector<5x84xf32>, vector<5x84xf32>, vector<5x84xf32> -> vector<5x504xf32>
    %73 = vector.extract_strided_slice %63 {offsets = [7, 0], sizes = [7, 84], strides = [1, 1]} : vector<28x84xf32> to vector<7x84xf32>
    %74 = vector.extract_strided_slice %63 {offsets = [21, 0], sizes = [7, 84], strides = [1, 1]} : vector<28x84xf32> to vector<7x84xf32>
    %75 = vector.extract_strided_slice %73 {offsets = [0, 0], sizes = [5, 84], strides = [1, 1]} : vector<7x84xf32> to vector<5x84xf32>
    %76 = vector.extract_strided_slice %74 {offsets = [0, 0], sizes = [5, 84], strides = [1, 1]} : vector<7x84xf32> to vector<5x84xf32>
    %77 = vector.extract_strided_slice %73 {offsets = [1, 0], sizes = [5, 84], strides = [1, 1]} : vector<7x84xf32> to vector<5x84xf32>
    %78 = vector.extract_strided_slice %74 {offsets = [1, 0], sizes = [5, 84], strides = [1, 1]} : vector<7x84xf32> to vector<5x84xf32>
    %79 = vector.extract_strided_slice %73 {offsets = [2, 0], sizes = [5, 84], strides = [1, 1]} : vector<7x84xf32> to vector<5x84xf32>
    %80 = vector.extract_strided_slice %74 {offsets = [2, 0], sizes = [5, 84], strides = [1, 1]} : vector<7x84xf32> to vector<5x84xf32>
    %81 = tpu.concatenate %75, %76, %77, %78, %79, %80 in 1 : vector<5x84xf32>, vector<5x84xf32>, vector<5x84xf32>, vector<5x84xf32>, vector<5x84xf32>, vector<5x84xf32> -> vector<5x504xf32>
    %82 = tpu.concatenate %72, %81 in 0 : vector<5x504xf32>, vector<5x504xf32> -> vector<10x504xf32>
    %83 = arith.truncf %82 : vector<10x504xf32> to vector<10x504xbf16>
    %c0_11 = arith.constant 0 : index
    %c0_12 = arith.constant 0 : index
    %84 = vector.load %arg4[%c0_11, %c0_12] : memref<504x320xbf16, #tpu.memory_space<vmem>>, vector<504x320xbf16>
    %cst_13 = arith.constant dense<0.000000e+00> : vector<10x320xf32>
    %85 = tpu.matmul %83, %84, %cst_13 {dimension_numbers = #tpu.dot_dimension_numbers<[1], [0], [0], [1], [0, 0, 1, 1], [], []>} : vector<10x504xbf16>, vector<504x320xbf16>, vector<10x320xf32> -> vector<10x320xf32>
    %86 = vector.extract_strided_slice %85 {offsets = [0, 0], sizes = [10, 80], strides = [1, 1]} : vector<10x320xf32> to vector<10x80xf32>
    %87 = vector.extract_strided_slice %85 {offsets = [0, 80], sizes = [10, 80], strides = [1, 1]} : vector<10x320xf32> to vector<10x80xf32>
    %88 = arith.maximumf %86, %87 : vector<10x80xf32>
    %89 = vector.extract_strided_slice %85 {offsets = [0, 160], sizes = [10, 80], strides = [1, 1]} : vector<10x320xf32> to vector<10x80xf32>
    %90 = vector.extract_strided_slice %85 {offsets = [0, 240], sizes = [10, 80], strides = [1, 1]} : vector<10x320xf32> to vector<10x80xf32>
    %91 = arith.maximumf %89, %90 : vector<10x80xf32>
    %92 = arith.maximumf %88, %91 : vector<10x80xf32>
    %c0_14 = arith.constant 0 : index
    %c0_15 = arith.constant 0 : index
    %93 = vector.load %arg5[%c0_14, %c0_15] : memref<1x80xf32, #tpu.memory_space<vmem>>, vector<1x80xf32>
    %94 = vector.broadcast %93 : vector<1x80xf32> to vector<10x80xf32>
    %95 = arith.addf %92, %94 : vector<10x80xf32>
    %cst_16 = arith.constant 0.000000e+00 : f32
    %96 = vector.broadcast %cst_16 : f32 to vector<10x80xf32>
    %97 = arith.maximumf %95, %96 : vector<10x80xf32>
    %98 = vector.extract_strided_slice %97 {offsets = [0, 0], sizes = [5, 80], strides = [1, 1]} : vector<10x80xf32> to vector<5x80xf32>
    %99 = vector.extract_strided_slice %98 {offsets = [0, 0], sizes = [1, 80], strides = [1, 1]} : vector<5x80xf32> to vector<1x80xf32>
    %100 = vector.extract_strided_slice %98 {offsets = [1, 0], sizes = [1, 80], strides = [1, 1]} : vector<5x80xf32> to vector<1x80xf32>
    %101 = vector.extract_strided_slice %98 {offsets = [2, 0], sizes = [1, 80], strides = [1, 1]} : vector<5x80xf32> to vector<1x80xf32>
    %102 = vector.extract_strided_slice %98 {offsets = [3, 0], sizes = [1, 80], strides = [1, 1]} : vector<5x80xf32> to vector<1x80xf32>
    %103 = vector.extract_strided_slice %98 {offsets = [4, 0], sizes = [1, 80], strides = [1, 1]} : vector<5x80xf32> to vector<1x80xf32>
    %104 = tpu.concatenate %99, %100, %101, %102, %103 in 1 : vector<1x80xf32>, vector<1x80xf32>, vector<1x80xf32>, vector<1x80xf32>, vector<1x80xf32> -> vector<1x400xf32>
    %105 = vector.extract_strided_slice %97 {offsets = [5, 0], sizes = [5, 80], strides = [1, 1]} : vector<10x80xf32> to vector<5x80xf32>
    %106 = vector.extract_strided_slice %105 {offsets = [0, 0], sizes = [1, 80], strides = [1, 1]} : vector<5x80xf32> to vector<1x80xf32>
    %107 = vector.extract_strided_slice %105 {offsets = [1, 0], sizes = [1, 80], strides = [1, 1]} : vector<5x80xf32> to vector<1x80xf32>
    %108 = vector.extract_strided_slice %105 {offsets = [2, 0], sizes = [1, 80], strides = [1, 1]} : vector<5x80xf32> to vector<1x80xf32>
    %109 = vector.extract_strided_slice %105 {offsets = [3, 0], sizes = [1, 80], strides = [1, 1]} : vector<5x80xf32> to vector<1x80xf32>
    %110 = vector.extract_strided_slice %105 {offsets = [4, 0], sizes = [1, 80], strides = [1, 1]} : vector<5x80xf32> to vector<1x80xf32>
    %111 = tpu.concatenate %106, %107, %108, %109, %110 in 1 : vector<1x80xf32>, vector<1x80xf32>, vector<1x80xf32>, vector<1x80xf32>, vector<1x80xf32> -> vector<1x400xf32>
    %112 = tpu.concatenate %104, %111 in 0 : vector<1x400xf32>, vector<1x400xf32> -> vector<2x400xf32>
    %113 = arith.truncf %112 : vector<2x400xf32> to vector<2x400xbf16>
    %c0_17 = arith.constant 0 : index
    %c0_18 = arith.constant 0 : index
    %114 = vector.load %arg6[%c0_17, %c0_18] : memref<400x128xbf16, #tpu.memory_space<vmem>>, vector<400x128xbf16>
    %cst_19 = arith.constant dense<0.000000e+00> : vector<2x128xf32>
    %115 = tpu.matmul %113, %114, %cst_19 {dimension_numbers = #tpu.dot_dimension_numbers<[1], [0], [0], [1], [0, 0, 1, 1], [], []>} : vector<2x400xbf16>, vector<400x128xbf16>, vector<2x128xf32> -> vector<2x128xf32>
    %c0_20 = arith.constant 0 : index
    %c0_21 = arith.constant 0 : index
    %116 = vector.load %arg7[%c0_20, %c0_21] : memref<1x128xf32, #tpu.memory_space<vmem>>, vector<1x128xf32>
    %117 = vector.broadcast %116 : vector<1x128xf32> to vector<2x128xf32>
    %118 = arith.addf %115, %117 : vector<2x128xf32>
    %cst_22 = arith.constant 0.000000e+00 : f32
    %119 = vector.broadcast %cst_22 : f32 to vector<2x128xf32>
    %120 = arith.maximumf %118, %119 : vector<2x128xf32>
    %121 = arith.truncf %120 : vector<2x128xf32> to vector<2x128xbf16>
    %c0_23 = arith.constant 0 : index
    %c0_24 = arith.constant 0 : index
    %122 = vector.load %arg8[%c0_23, %c0_24] : memref<128x84xbf16, #tpu.memory_space<vmem>>, vector<128x84xbf16>
    %cst_25 = arith.constant dense<0.000000e+00> : vector<2x84xf32>
    %123 = tpu.matmul %121, %122, %cst_25 {dimension_numbers = #tpu.dot_dimension_numbers<[1], [0], [0], [1], [0, 0, 1, 1], [], []>} : vector<2x128xbf16>, vector<128x84xbf16>, vector<2x84xf32> -> vector<2x84xf32>
    %c0_26 = arith.constant 0 : index
    %c0_27 = arith.constant 0 : index
    %124 = vector.load %arg9[%c0_26, %c0_27] : memref<1x84xf32, #tpu.memory_space<vmem>>, vector<1x84xf32>
    %125 = vector.broadcast %124 : vector<1x84xf32> to vector<2x84xf32>
    %126 = arith.addf %123, %125 : vector<2x84xf32>
    %cst_28 = arith.constant 0.000000e+00 : f32
    %127 = vector.broadcast %cst_28 : f32 to vector<2x84xf32>
    %128 = arith.maximumf %126, %127 : vector<2x84xf32>
    %129 = arith.truncf %128 : vector<2x84xf32> to vector<2x84xbf16>
    %c0_29 = arith.constant 0 : index
    %c0_30 = arith.constant 0 : index
    %130 = vector.load %arg10[%c0_29, %c0_30] : memref<84x128xbf16, #tpu.memory_space<vmem>>, vector<84x128xbf16>
    %cst_31 = arith.constant dense<0.000000e+00> : vector<2x128xf32>
    %131 = tpu.matmul %129, %130, %cst_31 {dimension_numbers = #tpu.dot_dimension_numbers<[1], [0], [0], [1], [0, 0, 1, 1], [], []>} : vector<2x84xbf16>, vector<84x128xbf16>, vector<2x128xf32> -> vector<2x128xf32>
    %c0_32 = arith.constant 0 : index
    %c0_33 = arith.constant 0 : index
    %132 = vector.load %arg11[%c0_32, %c0_33] : memref<1x128xf32, #tpu.memory_space<vmem>>, vector<1x128xf32>
    %133 = vector.broadcast %132 : vector<1x128xf32> to vector<2x128xf32>
    %134 = arith.addf %131, %133 : vector<2x128xf32>
    %c0_34 = arith.constant 0 : index
    %c0_35 = arith.constant 0 : index
    %135 = vector.load %arg12[%c0_34, %c0_35] : memref<2x128xf32, #tpu.memory_space<vmem>>, vector<2x128xf32>
    tpu.vector_store %arg12[%c0_34, %c0_35], %134 {strides = array<i32>} : memref<2x128xf32, #tpu.memory_space<vmem>>, vector<2x128xf32>,
    return
  }
  func.func @transform_0(%arg0: i32) -> (i32, i32, i32, i32) {
    %c0_i32 = arith.constant 0 : i32
    %c0_i32_0 = arith.constant 0 : i32
    %c0_i32_1 = arith.constant 0 : i32
    %c0_i32_2 = arith.constant 0 : i32
    return %arg0, %c0_i32, %c0_i32_0, %c0_i32_1 : i32, i32, i32, i32
  }
  func.func @transform_1(%arg0: i32) -> (i32, i32) {
    %c0_i32 = arith.constant 0 : i32
    %c0_i32_0 = arith.constant 0 : i32
    %c0_i32_1 = arith.constant 0 : i32
    return %c0_i32, %c0_i32_0 : i32, i32
  }
  func.func @transform_2(%arg0: i32) -> (i32, i32) {
    %c0_i32 = arith.constant 0 : i32
    %c0_i32_0 = arith.constant 0 : i32
    %c0_i32_1 = arith.constant 0 : i32
    return %c0_i32, %c0_i32_0 : i32, i32
  }
  func.func @transform_3(%arg0: i32) -> (i32, i32) {
    %c0_i32 = arith.constant 0 : i32
    %c0_i32_0 = arith.constant 0 : i32
    %c0_i32_1 = arith.constant 0 : i32
    return %c0_i32, %c0_i32_0 : i32, i32
  }
  func.func @transform_4(%arg0: i32) -> (i32, i32) {
    %c0_i32 = arith.constant 0 : i32
    %c0_i32_0 = arith.constant 0 : i32
    %c0_i32_1 = arith.constant 0 : i32
    return %c0_i32, %c0_i32_0 : i32, i32
  }
  func.func @transform_5(%arg0: i32) -> (i32, i32) {
    %c0_i32 = arith.constant 0 : i32
    %c0_i32_0 = arith.constant 0 : i32
    %c0_i32_1 = arith.constant 0 : i32
    return %c0_i32, %c0_i32_0 : i32, i32
  }
  func.func @transform_6(%arg0: i32) -> (i32, i32) {
    %c0_i32 = arith.constant 0 : i32
    %c0_i32_0 = arith.constant 0 : i32
    %c0_i32_1 = arith.constant 0 : i32
    return %c0_i32, %c0_i32_0 : i32, i32
  }
  func.func @transform_7(%arg0: i32) -> (i32, i32) {
    %c0_i32 = arith.constant 0 : i32
    %c0_i32_0 = arith.constant 0 : i32
    %c0_i32_1 = arith.constant 0 : i32
    return %c0_i32, %c0_i32_0 : i32, i32
  }
  func.func @transform_8(%arg0: i32) -> (i32, i32) {
    %c0_i32 = arith.constant 0 : i32
    %c0_i32_0 = arith.constant 0 : i32
    %c0_i32_1 = arith.constant 0 : i32
    return %c0_i32, %c0_i32_0 : i32, i32
  }
  func.func @transform_9(%arg0: i32) -> (i32, i32) {
    %c0_i32 = arith.constant 0 : i32
    %c0_i32_0 = arith.constant 0 : i32
    %c0_i32_1 = arith.constant 0 : i32
    return %c0_i32, %c0_i32_0 : i32, i32
  }
  func.func @transform_10(%arg0: i32) -> (i32, i32) {
    %c0_i32 = arith.constant 0 : i32
    %c0_i32_0 = arith.constant 0 : i32
    %c0_i32_1 = arith.constant 0 : i32
    return %c0_i32, %c0_i32_0 : i32, i32
  }
  func.func @transform_11(%arg0: i32) -> (i32, i32) {
    %c0_i32 = arith.constant 0 : i32
    %c0_i32_0 = arith.constant 0 : i32
    return %arg0, %c0_i32 : i32, i32
  }
}

</mosaic_0001>

<llo_original>
// kernel: forward.1
$region0: #{forward.1}
  #allocation0 [shape = 'u32[]', space=smem, size = 0x4, offset = 0x4, fixed_abs, tag = 'smem constant byte address 0x4 - core index']
  #allocation1 [shape = 'u32[144,128]{1,0:T(1,128)}', space=vmem, size = 0x12000, scoped, tag = 'internal scratch']
  %s0 = inlined_call_operand.vmem [shape: f32[2,4,8,96], index: 0, kind: input, shape index: {}]
  %s1 = inlined_call_operand.vmem [shape: bf16[576,336], index: 1, kind: input, shape index: {}]
  %s2 = inlined_call_operand.vmem [shape: f32[1,84], index: 2, kind: input, shape index: {}]
  %s3 = inlined_call_operand.vmem [shape: bf16[504,320], index: 3, kind: input, shape index: {}]
  %s4 = inlined_call_operand.vmem [shape: f32[1,80], index: 4, kind: input, shape index: {}]
  %s5 = inlined_call_operand.vmem [shape: bf16[400,128], index: 5, kind: input, shape index: {}]
  %s6 = inlined_call_operand.vmem [shape: f32[1,128], index: 6, kind: input, shape index: {}]
  %s7 = inlined_call_operand.vmem [shape: bf16[128,84], index: 7, kind: input, shape index: {}]
  %s8 = inlined_call_operand.vmem [shape: f32[1,84], index: 8, kind: input, shape index: {}]
  %s9 = inlined_call_operand.vmem [shape: bf16[84,128], index: 9, kind: input, shape index: {}]
  %s10 = inlined_call_operand.vmem [shape: f32[1,128], index: 10, kind: input, shape index: {}]
  %s11 = inlined_call_operand.hbm [shape: f32[2,128], index: 11, kind: output, shape index: {}]
  %s12 = sld [smem:[#allocation0]]
  $region54: #{forward.1} parent=0
    _
  %s14 = ssub.s32 1, %s12
  %s15 = scalar_select 0, %s14, %s12
  $region1: #{forward.1} parent=0
    #allocation2 [shape = 'u8[1024]{0}', space=vmem, size = 0x400, scoped, tag = 'output window, operand 0, single buffered']
    #allocation3 [shape = 's32[1]{0}', space=sflag, size = 0x4, scoped, tag = 'scoped memory for forward.1']
    %16 = vsyncpa [#allocation3], 0
    // Predicated region
    $region2: #{forward.1} parent=1 // pred_check
      _
    $region3: #{forward.1} parent=1 // pred_check_branch
      %18 = sbr.rel (0) target = $region5
    $region4: #{forward.1} parent=1 // pred_region
      _
    $region5: #{forward.1} parent=1 // pred_fallthru
      _
    // Predicated region
    $region6: #{forward.1} parent=1 // pred_check
      _
    $region7: #{forward.1} parent=1 // pred_check_branch
      %20 = sbr.rel (0) target = $region9
    $region8: #{forward.1} parent=1 // pred_region
      _
    $region9: #{forward.1} parent=1 // pred_fallthru
      _
    // Predicated region
    $region10: #{forward.1} parent=1 // pred_check
      _
    $region11: #{forward.1} parent=1 // pred_check_branch
      %22 = sbr.rel (0) target = $region13
    $region12: #{forward.1} parent=1 // pred_region
      _
    $region13: #{forward.1} parent=1 // pred_fallthru
      _
    // Predicated region
    $region14: #{forward.1} parent=1 // pred_check
      _
    $region15: #{forward.1} parent=1 // pred_check_branch
      %24 = sbr.rel (0) target = $region17
    $region16: #{forward.1} parent=1 // pred_region
      _
    $region17: #{forward.1} parent=1 // pred_fallthru
      _
    // Predicated region
    $region18: #{forward.1} parent=1 // pred_check
      _
    $region19: #{forward.1} parent=1 // pred_check_branch
      %26 = sbr.rel (0) target = $region21
    $region20: #{forward.1} parent=1 // pred_region
      _
    $region21: #{forward.1} parent=1 // pred_fallthru
      _
    // Predicated region
    $region22: #{forward.1} parent=1 // pred_check
      _
    $region23: #{forward.1} parent=1 // pred_check_branch
      %28 = sbr.rel (0) target = $region25
    $region24: #{forward.1} parent=1 // pred_region
      _
    $region25: #{forward.1} parent=1 // pred_fallthru
      _
    // Predicated region
    $region26: #{forward.1} parent=1 // pred_check
      _
    $region27: #{forward.1} parent=1 // pred_check_branch
      %30 = sbr.rel (0) target = $region29
    $region28: #{forward.1} parent=1 // pred_region
      _
    $region29: #{forward.1} parent=1 // pred_fallthru
      _
    // Predicated region
    $region30: #{forward.1} parent=1 // pred_check
      _
    $region31: #{forward.1} parent=1 // pred_check_branch
      %32 = sbr.rel (0) target = $region33
    $region32: #{forward.1} parent=1 // pred_region
      _
    $region33: #{forward.1} parent=1 // pred_fallthru
      _
    // Predicated region
    $region34: #{forward.1} parent=1 // pred_check
      _
    $region35: #{forward.1} parent=1 // pred_check_branch
      %34 = sbr.rel (0) target = $region37
    $region36: #{forward.1} parent=1 // pred_region
      _
    $region37: #{forward.1} parent=1 // pred_fallthru
      _
    // Predicated region
    $region38: #{forward.1} parent=1 // pred_check
      _
    $region39: #{forward.1} parent=1 // pred_check_branch
      %36 = sbr.rel (0) target = $region41
    $region40: #{forward.1} parent=1 // pred_region
      _
    $region41: #{forward.1} parent=1 // pred_fallthru
      _
    // Predicated region
    $region42: #{forward.1} parent=1 // pred_check
      _
    $region43: #{forward.1} parent=1 // pred_check_branch
      %38 = sbr.rel (0) target = $region45
    $region44: #{forward.1} parent=1 // pred_region
      _
    $region45: #{forward.1} parent=1 // pred_fallthru
      _
    %v40 = vld [vmem:[%s0] sm:$0xff]
    %v41 = vld [vmem:[%s0 + $0x8] sm:$0xff]
    %v42 = vld [vmem:[%s0 + $0x10] sm:$0xff]
    %v43 = vld [vmem:[%s0 + $0x18] sm:$0xff]
    %45 = vrot.lane.b32.xlu0 %v41, 96
    %v46 = vpop.permute.xlu0 %45
    %49 = vrot.lane.b32.xlu0 %v42, 64
    %v50 = vpop.permute.xlu0 %49
    %53 = vrot.lane.b32.xlu0 %v43, 32
    %v54 = vpop.permute.xlu0 %53
    %v57 = vrot.slane %v40, 1
    %v59 = vrot.slane %v41, 1
    %60 = vrot.lane.b32.xlu0 %v59, 96
    %v61 = vpop.permute.xlu0 %60
    %vm63 = vcmask 785408
    %v64 = vsel %vm63, %v40, %v46
    %vm65 = vcmask 523264
    %v66 = vsel %vm65, %v46, %v50
    %vm67 = vcmask 261120
    %v68 = vsel %vm67, %v50, %v54
    %v69 = vsel %vm63, %v57, %v61
    %70 = vrot.lane.b32.xlu0 %v43, 96
    %v71 = vpop.permute.xlu0 %70
    %73 = vrot.lane.b32.xlu0 %v57, 64
    %v74 = vpop.permute.xlu0 %73
    %76 = vrot.lane.b32.xlu0 %v59, 32
    %v77 = vpop.permute.xlu0 %76
    %v79 = vrot.slane %v42, 1
    %v81 = vrot.slane %v43, 1
    %82 = vrot.lane.b32.xlu0 %v81, 96
    %v83 = vpop.permute.xlu0 %82
    %v85 = vsel %vm63, %v42, %v71
    %v86 = vsel %vm65, %v71, %v74
    %v87 = vsel %vm67, %v74, %v77
    %v88 = vsel %vm63, %v79, %v83
    %s89 = scalar_lea.vmem %s0, 32
    %v90 = vld [vmem:[%s89] sm:$0xff]
    %v91 = vld [vmem:[%s89 + $0x8] sm:$0xff]
    %v92 = vld [vmem:[%s89 + $0x10] sm:$0xff]
    %v93 = vld [vmem:[%s89 + $0x18] sm:$0xff]
    %95 = vrot.lane.b32.xlu0 %v91, 96
    %v96 = vpop.permute.xlu0 %95
    %99 = vrot.lane.b32.xlu0 %v92, 64
    %v100 = vpop.permute.xlu0 %99
    %103 = vrot.lane.b32.xlu0 %v93, 32
    %v104 = vpop.permute.xlu0 %103
    %v107 = vrot.slane %v90, 1
    %v109 = vrot.slane %v91, 1
    %110 = vrot.lane.b32.xlu0 %v109, 96
    %v111 = vpop.permute.xlu0 %110
    %v113 = vsel %vm63, %v90, %v96
    %v114 = vsel %vm65, %v96, %v100
    %v115 = vsel %vm67, %v100, %v104
    %v116 = vsel %vm63, %v107, %v111
    %117 = vrot.lane.b32.xlu0 %v93, 96
    %v118 = vpop.permute.xlu0 %117
    %120 = vrot.lane.b32.xlu0 %v107, 64
    %v121 = vpop.permute.xlu0 %120
    %123 = vrot.lane.b32.xlu0 %v109, 32
    %v124 = vpop.permute.xlu0 %123
    %v126 = vrot.slane %v92, 1
    %v128 = vrot.slane %v93, 1
    %129 = vrot.lane.b32.xlu0 %v128, 96
    %v130 = vpop.permute.xlu0 %129
    %v132 = vsel %vm63, %v92, %v118
    %v133 = vsel %vm65, %v118, %v121
    %v134 = vsel %vm67, %v121, %v124
    %v135 = vsel %vm63, %v126, %v130
    %v140 = vrot.slane %v113, 1
    %v141 = vrot.slane %v114, 1
    %v142 = vrot.slane %v115, 1
    %v143 = vrot.slane %v116, 1
    %v144 = vrot.slane %v111, 1
    %v154 = vrot.slane %v85, 2
    %v155 = vrot.slane %v86, 2
    %v156 = vrot.slane %v87, 2
    %v157 = vrot.slane %v88, 2
    %v158 = vrot.slane %v83, 2
    %v168 = vrot.slane %v132, 3
    %v169 = vrot.slane %v133, 3
    %v170 = vrot.slane %v134, 3
    %v171 = vrot.slane %v135, 3
    %v172 = vrot.slane %v130, 3
    %vm178 = vcmask 1046528
    %v179 = vsel %vm178, %v64, %v140
    %v180 = vsel %vm178, %v66, %v141
    %v181 = vsel %vm178, %v68, %v142
    %v182 = vsel %vm178, %v69, %v143
    %v183 = vsel %vm178, %v61, %v144
    %vm184 = vcmask 1045504
    %v185 = vsel %vm184, %v140, %v154
    %v186 = vsel %vm184, %v141, %v155
    %v187 = vsel %vm184, %v142, %v156
    %v188 = vsel %vm184, %v143, %v157
    %v189 = vsel %vm184, %v144, %v158
    %vm190 = vcmask 1044480
    %v191 = vsel %vm190, %v154, %v168
    %v192 = vsel %vm190, %v155, %v169
    %v193 = vsel %vm190, %v156, %v170
    %v194 = vsel %vm190, %v157, %v171
    %v195 = vsel %vm190, %v158, %v172
    %v196 = vpack.c.bf16 %v185, %v179
    %v197 = vpack.c.bf16 %v186, %v180
    %v198 = vpack.c.bf16 %v187, %v181
    %v199 = vpack.c.bf16 %v188, %v182
    %v200 = vpack.c.bf16 %v189, %v183
    %v201 = vpack.c.bf16 %v168, %v191
    %v202 = vpack.c.bf16 %v169, %v192
    %v203 = vpack.c.bf16 %v170, %v193
    %v204 = vpack.c.bf16 %v171, %v194
    %v205 = vpack.c.bf16 %v172, %v195
    %v206 = vld [vmem:[%s1] sm:$0xff]
    %v207 = vld [vmem:[%s1 + $0x8] sm:$0xf]
    %v208 = vld [vmem:[%s1 + $0xc] sm:$0xff]
    %v209 = vld [vmem:[%s1 + $0x14] sm:$0xf]
    %v210 = vld [vmem:[%s1 + $0x18] sm:$0xff]
    %v211 = vld [vmem:[%s1 + $0x20] sm:$0xf]
    %v212 = vld [vmem:[%s1 + $0x24] sm:$0xff]
    %v213 = vld [vmem:[%s1 + $0x2c] sm:$0xf]
    %v214 = vld [vmem:[%s1 + $0x30] sm:$0xff]
    %v215 = vld [vmem:[%s1 + $0x38] sm:$0xf]
    %v216 = vld [vmem:[%s1 + $0x3c] sm:$0xff]
    %v217 = vld [vmem:[%s1 + $0x44] sm:$0xf]
    %v218 = vld [vmem:[%s1 + $0x48] sm:$0xff]
    %v219 = vld [vmem:[%s1 + $0x50] sm:$0xf]
    %v220 = vld [vmem:[%s1 + $0x54] sm:$0xff]
    %v221 = vld [vmem:[%s1 + $0x5c] sm:$0xf]
    %v222 = vld [vmem:[%s1 + $0x60] sm:$0xff]
    %v223 = vld [vmem:[%s1 + $0x68] sm:$0xf]
    %v224 = vld [vmem:[%s1 + $0x6c] sm:$0xff]
    %v225 = vld [vmem:[%s1 + $0x74] sm:$0xf]
    %v226 = vld [vmem:[%s1 + $0x78] sm:$0xff]
    %v227 = vld [vmem:[%s1 + $0x80] sm:$0xf]
    %v228 = vld [vmem:[%s1 + $0x84] sm:$0xff]
    %v229 = vld [vmem:[%s1 + $0x8c] sm:$0xf]
    %v230 = vld [vmem:[%s1 + $0x90] sm:$0xff]
    %v231 = vld [vmem:[%s1 + $0x98] sm:$0xf]
    %v232 = vld [vmem:[%s1 + $0x9c] sm:$0xff]
    %v233 = vld [vmem:[%s1 + $0xa4] sm:$0xf]
    %v234 = vld [vmem:[%s1 + $0xa8] sm:$0xff]
    %v235 = vld [vmem:[%s1 + $0xb0] sm:$0xf]
    %v236 = vld [vmem:[%s1 + $0xb4] sm:$0xff]
    %v237 = vld [vmem:[%s1 + $0xbc] sm:$0xf]
    %v238 = vld [vmem:[%s1 + $0xc0] sm:$0xff]
    %v239 = vld [vmem:[%s1 + $0xc8] sm:$0xf]
    %v240 = vld [vmem:[%s1 + $0xcc] sm:$0xff]
    %v241 = vld [vmem:[%s1 + $0xd4] sm:$0xf]
    %v242 = vld [vmem:[%s1 + $0xd8] sm:$0xff]
    %v243 = vld [vmem:[%s1 + $0xe0] sm:$0xf]
    %v244 = vld [vmem:[%s1 + $0xe4] sm:$0xff]
    %v245 = vld [vmem:[%s1 + $0xec] sm:$0xf]
    %v246 = vld [vmem:[%s1 + $0xf0] sm:$0xff]
    %v247 = vld [vmem:[%s1 + $0xf8] sm:$0xf]
    %v248 = vld [vmem:[%s1 + $0xfc] sm:$0xff]
    %v249 = vld [vmem:[%s1 + $0x104] sm:$0xf]
    %v250 = vld [vmem:[%s1 + $0x108] sm:$0xff]
    %v251 = vld [vmem:[%s1 + $0x110] sm:$0xf]
    %v252 = vld [vmem:[%s1 + $0x114] sm:$0xff]
    %v253 = vld [vmem:[%s1 + $0x11c] sm:$0xf]
    %v254 = vld [vmem:[%s1 + $0x120] sm:$0xff]
    %v255 = vld [vmem:[%s1 + $0x128] sm:$0xf]
    %v256 = vld [vmem:[%s1 + $0x12c] sm:$0xff]
    %v257 = vld [vmem:[%s1 + $0x134] sm:$0xf]
    %v258 = vld [vmem:[%s1 + $0x138] sm:$0xff]
    %v259 = vld [vmem:[%s1 + $0x140] sm:$0xf]
    %v260 = vld [vmem:[%s1 + $0x144] sm:$0xff]
    %v261 = vld [vmem:[%s1 + $0x14c] sm:$0xf]
    %v262 = vld [vmem:[%s1 + $0x150] sm:$0xff]
    %v263 = vld [vmem:[%s1 + $0x158] sm:$0xf]
    %v264 = vld [vmem:[%s1 + $0x15c] sm:$0xff]
    %v265 = vld [vmem:[%s1 + $0x164] sm:$0xf]
    %v266 = vld [vmem:[%s1 + $0x168] sm:$0xff]
    %v267 = vld [vmem:[%s1 + $0x170] sm:$0xf]
    %v268 = vld [vmem:[%s1 + $0x174] sm:$0xff]
    %v269 = vld [vmem:[%s1 + $0x17c] sm:$0xf]
    %v270 = vld [vmem:[%s1 + $0x180] sm:$0xff]
    %v271 = vld [vmem:[%s1 + $0x188] sm:$0xf]
    %v272 = vld [vmem:[%s1 + $0x18c] sm:$0xff]
    %v273 = vld [vmem:[%s1 + $0x194] sm:$0xf]
    %v274 = vld [vmem:[%s1 + $0x198] sm:$0xff]
    %v275 = vld [vmem:[%s1 + $0x1a0] sm:$0xf]
    %v276 = vld [vmem:[%s1 + $0x1a4] sm:$0xff]
    %v277 = vld [vmem:[%s1 + $0x1ac] sm:$0xf]
    %v278 = vld [vmem:[%s1 + $0x1b0] sm:$0xff]
    %v279 = vld [vmem:[%s1 + $0x1b8] sm:$0xf]
    %v280 = vld [vmem:[%s1 + $0x1bc] sm:$0xff]
    %v281 = vld [vmem:[%s1 + $0x1c4] sm:$0xf]
    %v282 = vld [vmem:[%s1 + $0x1c8] sm:$0xff]
    %v283 = vld [vmem:[%s1 + $0x1d0] sm:$0xf]
    %v284 = vld [vmem:[%s1 + $0x1d4] sm:$0xff]
    %v285 = vld [vmem:[%s1 + $0x1dc] sm:$0xf]
    %v286 = vld [vmem:[%s1 + $0x1e0] sm:$0xff]
    %v287 = vld [vmem:[%s1 + $0x1e8] sm:$0xf]
    %v288 = vld [vmem:[%s1 + $0x1ec] sm:$0xff]
    %v289 = vld [vmem:[%s1 + $0x1f4] sm:$0xf]
    %v290 = vld [vmem:[%s1 + $0x1f8] sm:$0xff]
    %v291 = vld [vmem:[%s1 + $0x200] sm:$0xf]
    %v292 = vld [vmem:[%s1 + $0x204] sm:$0xff]
    %v293 = vld [vmem:[%s1 + $0x20c] sm:$0xf]
    %v294 = vld [vmem:[%s1 + $0x210] sm:$0xff]
    %v295 = vld [vmem:[%s1 + $0x218] sm:$0xf]
    %v296 = vld [vmem:[%s1 + $0x21c] sm:$0xff]
    %v297 = vld [vmem:[%s1 + $0x224] sm:$0xf]
    %v298 = vld [vmem:[%s1 + $0x228] sm:$0xff]
    %v299 = vld [vmem:[%s1 + $0x230] sm:$0xf]
    %v300 = vld [vmem:[%s1 + $0x234] sm:$0xff]
    %v301 = vld [vmem:[%s1 + $0x23c] sm:$0xf]
    %v302 = vld [vmem:[%s1 + $0x240] sm:$0xff]
    %v303 = vld [vmem:[%s1 + $0x248] sm:$0xf]
    %v304 = vld [vmem:[%s1 + $0x24c] sm:$0xff]
    %v305 = vld [vmem:[%s1 + $0x254] sm:$0xf]
    %v306 = vld [vmem:[%s1 + $0x258] sm:$0xff]
    %v307 = vld [vmem:[%s1 + $0x260] sm:$0xf]
    %v308 = vld [vmem:[%s1 + $0x264] sm:$0xff]
    %v309 = vld [vmem:[%s1 + $0x26c] sm:$0xf]
    %v310 = vld [vmem:[%s1 + $0x270] sm:$0xff]
    %v311 = vld [vmem:[%s1 + $0x278] sm:$0xf]
    %v312 = vld [vmem:[%s1 + $0x27c] sm:$0xff]
    %v313 = vld [vmem:[%s1 + $0x284] sm:$0xf]
    %v314 = vld [vmem:[%s1 + $0x288] sm:$0xff]
    %v315 = vld [vmem:[%s1 + $0x290] sm:$0xf]
    %v316 = vld [vmem:[%s1 + $0x294] sm:$0xff]
    %v317 = vld [vmem:[%s1 + $0x29c] sm:$0xf]
    %v318 = vld [vmem:[%s1 + $0x2a0] sm:$0xff]
    %v319 = vld [vmem:[%s1 + $0x2a8] sm:$0xf]
    %v320 = vld [vmem:[%s1 + $0x2ac] sm:$0xff]
    %v321 = vld [vmem:[%s1 + $0x2b4] sm:$0xf]
    %v322 = vld [vmem:[%s1 + $0x2b8] sm:$0xff]
    %v323 = vld [vmem:[%s1 + $0x2c0] sm:$0xf]
    %v324 = vld [vmem:[%s1 + $0x2c4] sm:$0xff]
    %v325 = vld [vmem:[%s1 + $0x2cc] sm:$0xf]
    %v326 = vld [vmem:[%s1 + $0x2d0] sm:$0xff]
    %v327 = vld [vmem:[%s1 + $0x2d8] sm:$0xf]
    %v328 = vld [vmem:[%s1 + $0x2dc] sm:$0xff]
    %v329 = vld [vmem:[%s1 + $0x2e4] sm:$0xf]
    %v330 = vld [vmem:[%s1 + $0x2e8] sm:$0xff]
    %v331 = vld [vmem:[%s1 + $0x2f0] sm:$0xf]
    %v332 = vld [vmem:[%s1 + $0x2f4] sm:$0xff]
    %v333 = vld [vmem:[%s1 + $0x2fc] sm:$0xf]
    %v334 = vld [vmem:[%s1 + $0x300] sm:$0xff]
    %v335 = vld [vmem:[%s1 + $0x308] sm:$0xf]
    %v336 = vld [vmem:[%s1 + $0x30c] sm:$0xff]
    %v337 = vld [vmem:[%s1 + $0x314] sm:$0xf]
    %v338 = vld [vmem:[%s1 + $0x318] sm:$0xff]
    %v339 = vld [vmem:[%s1 + $0x320] sm:$0xf]
    %v340 = vld [vmem:[%s1 + $0x324] sm:$0xff]
    %v341 = vld [vmem:[%s1 + $0x32c] sm:$0xf]
    %v342 = vld [vmem:[%s1 + $0x330] sm:$0xff]
    %v343 = vld [vmem:[%s1 + $0x338] sm:$0xf]
    %v344 = vld [vmem:[%s1 + $0x33c] sm:$0xff]
    %v345 = vld [vmem:[%s1 + $0x344] sm:$0xf]
    %v346 = vld [vmem:[%s1 + $0x348] sm:$0xff]
    %v347 = vld [vmem:[%s1 + $0x350] sm:$0xf]
    %v348 = vld [vmem:[%s1 + $0x354] sm:$0xff]
    %v349 = vld [vmem:[%s1 + $0x35c] sm:$0xf]
    %v494 = vunpack.c.l.b16 %v206
    %v495 = vunpack.c.h.b16 %v206
    %v496 = vunpack.c.l.b16 %v207
    %v497 = vunpack.c.l.b16 %v208
    %v498 = vunpack.c.h.b16 %v208
    %v499 = vunpack.c.l.b16 %v209
    %v500 = vunpack.c.l.b16 %v210
    %v501 = vunpack.c.h.b16 %v210
    %v502 = vunpack.c.l.b16 %v211
    %v503 = vunpack.c.l.b16 %v212
    %v504 = vunpack.c.h.b16 %v212
    %v505 = vunpack.c.l.b16 %v213
    %v506 = vunpack.c.l.b16 %v214
    %v507 = vunpack.c.h.b16 %v214
    %v508 = vunpack.c.l.b16 %v215
    %v509 = vunpack.c.l.b16 %v216
    %v510 = vunpack.c.h.b16 %v216
    %v511 = vunpack.c.l.b16 %v217
    %v512 = vunpack.c.l.b16 %v218
    %v513 = vunpack.c.h.b16 %v218
    %v514 = vunpack.c.l.b16 %v219
    %v515 = vunpack.c.l.b16 %v220
    %v516 = vunpack.c.h.b16 %v220
    %v517 = vunpack.c.l.b16 %v221
    %v518 = vunpack.c.l.b16 %v222
    %v519 = vunpack.c.h.b16 %v222
    %v520 = vunpack.c.l.b16 %v223
    %v521 = vunpack.c.l.b16 %v224
    %v522 = vunpack.c.h.b16 %v224
    %v523 = vunpack.c.l.b16 %v225
    %v524 = vunpack.c.l.b16 %v226
    %v525 = vunpack.c.h.b16 %v226
    %v526 = vunpack.c.l.b16 %v227
    %v527 = vunpack.c.l.b16 %v228
    %v528 = vunpack.c.h.b16 %v228
    %v529 = vunpack.c.l.b16 %v229
    %v530 = vunpack.c.l.b16 %v230
    %v531 = vunpack.c.h.b16 %v230
    %v532 = vunpack.c.l.b16 %v231
    %v533 = vunpack.c.l.b16 %v232
    %v534 = vunpack.c.h.b16 %v232
    %v535 = vunpack.c.l.b16 %v233
    %v536 = vunpack.c.l.b16 %v234
    %v537 = vunpack.c.h.b16 %v234
    %v538 = vunpack.c.l.b16 %v235
    %v539 = vunpack.c.l.b16 %v236
    %v540 = vunpack.c.h.b16 %v236
    %v541 = vunpack.c.l.b16 %v237
    %v542 = vunpack.c.l.b16 %v238
    %v543 = vunpack.c.h.b16 %v238
    %v544 = vunpack.c.l.b16 %v239
    %v545 = vunpack.c.l.b16 %v240
    %v546 = vunpack.c.h.b16 %v240
    %v547 = vunpack.c.l.b16 %v241
    %v548 = vunpack.c.l.b16 %v242
    %v549 = vunpack.c.h.b16 %v242
    %v550 = vunpack.c.l.b16 %v243
    %v551 = vunpack.c.l.b16 %v244
    %v552 = vunpack.c.h.b16 %v244
    %v553 = vunpack.c.l.b16 %v245
    %v554 = vunpack.c.l.b16 %v246
    %v555 = vunpack.c.h.b16 %v246
    %v556 = vunpack.c.l.b16 %v247
    %v557 = vunpack.c.l.b16 %v248
    %v558 = vunpack.c.h.b16 %v248
    %v559 = vunpack.c.l.b16 %v249
    %v560 = vunpack.c.l.b16 %v250
    %v561 = vunpack.c.h.b16 %v250
    %v562 = vunpack.c.l.b16 %v251
    %v563 = vunpack.c.l.b16 %v252
    %v564 = vunpack.c.h.b16 %v252
    %v565 = vunpack.c.l.b16 %v253
    %v566 = vunpack.c.l.b16 %v254
    %v567 = vunpack.c.h.b16 %v254
    %v568 = vunpack.c.l.b16 %v255
    %v569 = vunpack.c.l.b16 %v256
    %v570 = vunpack.c.h.b16 %v256
    %v571 = vunpack.c.l.b16 %v257
    %v572 = vunpack.c.l.b16 %v258
    %v573 = vunpack.c.h.b16 %v258
    %v574 = vunpack.c.l.b16 %v259
    %v575 = vunpack.c.l.b16 %v260
    %v576 = vunpack.c.h.b16 %v260
    %v577 = vunpack.c.l.b16 %v261
    %v578 = vunpack.c.l.b16 %v262
    %v579 = vunpack.c.h.b16 %v262
    %v580 = vunpack.c.l.b16 %v263
    %v581 = vunpack.c.l.b16 %v264
    %v582 = vunpack.c.h.b16 %v264
    %v583 = vunpack.c.l.b16 %v265
    %v584 = vunpack.c.l.b16 %v266
    %v585 = vunpack.c.h.b16 %v266
    %v586 = vunpack.c.l.b16 %v267
    %v587 = vunpack.c.l.b16 %v268
    %v588 = vunpack.c.h.b16 %v268
    %v589 = vunpack.c.l.b16 %v269
    %v590 = vunpack.c.l.b16 %v270
    %v591 = vunpack.c.h.b16 %v270
    %v592 = vunpack.c.l.b16 %v271
    %v593 = vunpack.c.l.b16 %v272
    %v594 = vunpack.c.h.b16 %v272
    %v595 = vunpack.c.l.b16 %v273
    %v596 = vunpack.c.l.b16 %v274
    %v597 = vunpack.c.h.b16 %v274
    %v598 = vunpack.c.l.b16 %v275
    %v599 = vunpack.c.l.b16 %v276
    %v600 = vunpack.c.h.b16 %v276
    %v601 = vunpack.c.l.b16 %v277
    %v602 = vunpack.c.l.b16 %v278
    %v603 = vunpack.c.h.b16 %v278
    %v604 = vunpack.c.l.b16 %v279
    %v605 = vunpack.c.l.b16 %v280
    %v606 = vunpack.c.h.b16 %v280
    %v607 = vunpack.c.l.b16 %v281
    %v608 = vunpack.c.l.b16 %v282
    %v609 = vunpack.c.h.b16 %v282
    %v610 = vunpack.c.l.b16 %v283
    %v611 = vunpack.c.l.b16 %v284
    %v612 = vunpack.c.h.b16 %v284
    %v613 = vunpack.c.l.b16 %v285
    %v614 = vunpack.c.l.b16 %v286
    %v615 = vunpack.c.h.b16 %v286
    %v616 = vunpack.c.l.b16 %v287
    %v617 = vunpack.c.l.b16 %v288
    %v618 = vunpack.c.h.b16 %v288
    %v619 = vunpack.c.l.b16 %v289
    %v620 = vunpack.c.l.b16 %v290
    %v621 = vunpack.c.h.b16 %v290
    %v622 = vunpack.c.l.b16 %v291
    %v623 = vunpack.c.l.b16 %v292
    %v624 = vunpack.c.h.b16 %v292
    %v625 = vunpack.c.l.b16 %v293
    %v626 = vunpack.c.l.b16 %v294
    %v627 = vunpack.c.h.b16 %v294
    %v628 = vunpack.c.l.b16 %v295
    %v629 = vunpack.c.l.b16 %v296
    %v630 = vunpack.c.h.b16 %v296
    %v631 = vunpack.c.l.b16 %v297
    %v632 = vunpack.c.l.b16 %v298
    %v633 = vunpack.c.h.b16 %v298
    %v634 = vunpack.c.l.b16 %v299
    %v635 = vunpack.c.l.b16 %v300
    %v636 = vunpack.c.h.b16 %v300
    %v637 = vunpack.c.l.b16 %v301
    %v638 = vunpack.c.l.b16 %v302
    %v639 = vunpack.c.h.b16 %v302
    %v640 = vunpack.c.l.b16 %v303
    %v641 = vunpack.c.l.b16 %v304
    %v642 = vunpack.c.h.b16 %v304
    %v643 = vunpack.c.l.b16 %v305
    %v644 = vunpack.c.l.b16 %v306
    %v645 = vunpack.c.h.b16 %v306
    %v646 = vunpack.c.l.b16 %v307
    %v647 = vunpack.c.l.b16 %v308
    %v648 = vunpack.c.h.b16 %v308
    %v649 = vunpack.c.l.b16 %v309
    %v650 = vunpack.c.l.b16 %v310
    %v651 = vunpack.c.h.b16 %v310
    %v652 = vunpack.c.l.b16 %v311
    %v653 = vunpack.c.l.b16 %v312
    %v654 = vunpack.c.h.b16 %v312
    %v655 = vunpack.c.l.b16 %v313
    %v656 = vunpack.c.l.b16 %v314
    %v657 = vunpack.c.h.b16 %v314
    %v658 = vunpack.c.l.b16 %v315
    %v659 = vunpack.c.l.b16 %v316
    %v660 = vunpack.c.h.b16 %v316
    %v661 = vunpack.c.l.b16 %v317
    %v662 = vunpack.c.l.b16 %v318
    %v663 = vunpack.c.h.b16 %v318
    %v664 = vunpack.c.l.b16 %v319
    %v665 = vunpack.c.l.b16 %v320
    %v666 = vunpack.c.h.b16 %v320
    %v667 = vunpack.c.l.b16 %v321
    %v668 = vunpack.c.l.b16 %v322
    %v669 = vunpack.c.h.b16 %v322
    %v670 = vunpack.c.l.b16 %v323
    %v671 = vunpack.c.l.b16 %v324
    %v672 = vunpack.c.h.b16 %v324
    %v673 = vunpack.c.l.b16 %v325
    %v674 = vunpack.c.l.b16 %v326
    %v675 = vunpack.c.h.b16 %v326
    %v676 = vunpack.c.l.b16 %v327
    %v677 = vunpack.c.l.b16 %v328
    %v678 = vunpack.c.h.b16 %v328
    %v679 = vunpack.c.l.b16 %v329
    %v680 = vunpack.c.l.b16 %v330
    %v681 = vunpack.c.h.b16 %v330
    %v682 = vunpack.c.l.b16 %v331
    %v683 = vunpack.c.l.b16 %v332
    %v684 = vunpack.c.h.b16 %v332
    %v685 = vunpack.c.l.b16 %v333
    %v686 = vunpack.c.l.b16 %v334
    %v687 = vunpack.c.h.b16 %v334
    %v688 = vunpack.c.l.b16 %v335
    %v689 = vunpack.c.l.b16 %v336
    %v690 = vunpack.c.h.b16 %v336
    %v691 = vunpack.c.l.b16 %v337
    %v692 = vunpack.c.l.b16 %v338
    %v693 = vunpack.c.h.b16 %v338
    %v694 = vunpack.c.l.b16 %v339
    %v695 = vunpack.c.l.b16 %v340
    %v696 = vunpack.c.h.b16 %v340
    %v697 = vunpack.c.l.b16 %v341
    %v698 = vunpack.c.l.b16 %v342
    %v699 = vunpack.c.h.b16 %v342
    %v700 = vunpack.c.l.b16 %v343
    %v701 = vunpack.c.l.b16 %v344
    %v702 = vunpack.c.h.b16 %v344
    %v703 = vunpack.c.l.b16 %v345
    %v704 = vunpack.c.l.b16 %v346
    %v705 = vunpack.c.h.b16 %v346
    %v706 = vunpack.c.l.b16 %v347
    %v707 = vunpack.c.l.b16 %v348
    %v708 = vunpack.c.h.b16 %v348
    %v709 = vunpack.c.l.b16 %v349
    %v710 = vpack.c.b16 %v497, %v494
    %v711 = vpack.c.b16 %v498, %v495
    %v712 = vpack.c.b16 %v499, %v496
    %v713 = vpack.c.b16 %v503, %v500
    %v714 = vpack.c.b16 %v504, %v501
    %v715 = vpack.c.b16 %v505, %v502
    %v716 = vpack.c.b16 %v509, %v506
    %v717 = vpack.c.b16 %v510, %v507
    %v718 = vpack.c.b16 %v511, %v508
    %v719 = vpack.c.b16 %v515, %v512
    %v720 = vpack.c.b16 %v516, %v513
    %v721 = vpack.c.b16 %v517, %v514
    %v722 = vpack.c.b16 %v521, %v518
    %v723 = vpack.c.b16 %v522, %v519
    %v724 = vpack.c.b16 %v523, %v520
    %v725 = vpack.c.b16 %v527, %v524
    %v726 = vpack.c.b16 %v528, %v525
    %v727 = vpack.c.b16 %v529, %v526
    %v728 = vpack.c.b16 %v533, %v530
    %v729 = vpack.c.b16 %v534, %v531
    %v730 = vpack.c.b16 %v535, %v532
    %v731 = vpack.c.b16 %v539, %v536
    %v732 = vpack.c.b16 %v540, %v537
    %v733 = vpack.c.b16 %v541, %v538
    %v734 = vpack.c.b16 %v545, %v542
    %v735 = vpack.c.b16 %v546, %v543
    %v736 = vpack.c.b16 %v547, %v544
    %v737 = vpack.c.b16 %v551, %v548
    %v738 = vpack.c.b16 %v552, %v549
    %v739 = vpack.c.b16 %v553, %v550
    %v740 = vpack.c.b16 %v557, %v554
    %v741 = vpack.c.b16 %v558, %v555
    %v742 = vpack.c.b16 %v559, %v556
    %v743 = vpack.c.b16 %v563, %v560
    %v744 = vpack.c.b16 %v564, %v561
    %v745 = vpack.c.b16 %v565, %v562
    %v746 = vpack.c.b16 %v569, %v566
    %v747 = vpack.c.b16 %v570, %v567
    %v748 = vpack.c.b16 %v571, %v568
    %v749 = vpack.c.b16 %v575, %v572
    %v750 = vpack.c.b16 %v576, %v573
    %v751 = vpack.c.b16 %v577, %v574
    %v752 = vpack.c.b16 %v581, %v578
    %v753 = vpack.c.b16 %v582, %v579
    %v754 = vpack.c.b16 %v583, %v580
    %v755 = vpack.c.b16 %v587, %v584
    %v756 = vpack.c.b16 %v588, %v585
    %v757 = vpack.c.b16 %v589, %v586
    %v758 = vpack.c.b16 %v593, %v590
    %v759 = vpack.c.b16 %v594, %v591
    %v760 = vpack.c.b16 %v595, %v592
    %v761 = vpack.c.b16 %v599, %v596
    %v762 = vpack.c.b16 %v600, %v597
    %v763 = vpack.c.b16 %v601, %v598
    %v764 = vpack.c.b16 %v605, %v602
    %v765 = vpack.c.b16 %v606, %v603
    %v766 = vpack.c.b16 %v607, %v604
    %v767 = vpack.c.b16 %v611, %v608
    %v768 = vpack.c.b16 %v612, %v609
    %v769 = vpack.c.b16 %v613, %v610
    %v770 = vpack.c.b16 %v617, %v614
    %v771 = vpack.c.b16 %v618, %v615
    %v772 = vpack.c.b16 %v619, %v616
    %v773 = vpack.c.b16 %v623, %v620
    %v774 = vpack.c.b16 %v624, %v621
    %v775 = vpack.c.b16 %v625, %v622
    %v776 = vpack.c.b16 %v629, %v626
    %v777 = vpack.c.b16 %v630, %v627
    %v778 = vpack.c.b16 %v631, %v628
    %v779 = vpack.c.b16 %v635, %v632
    %v780 = vpack.c.b16 %v636, %v633
    %v781 = vpack.c.b16 %v637, %v634
    %v782 = vpack.c.b16 %v641, %v638
    %v783 = vpack.c.b16 %v642, %v639
    %v784 = vpack.c.b16 %v643, %v640
    %v785 = vpack.c.b16 %v647, %v644
    %v786 = vpack.c.b16 %v648, %v645
    %v787 = vpack.c.b16 %v649, %v646
    %v788 = vpack.c.b16 %v653, %v650
    %v789 = vpack.c.b16 %v654, %v651
    %v790 = vpack.c.b16 %v655, %v652
    %v791 = vpack.c.b16 %v659, %v656
    %v792 = vpack.c.b16 %v660, %v657
    %v793 = vpack.c.b16 %v661, %v658
    %v794 = vpack.c.b16 %v665, %v662
    %v795 = vpack.c.b16 %v666, %v663
    %v796 = vpack.c.b16 %v667, %v664
    %v797 = vpack.c.b16 %v671, %v668
    %v798 = vpack.c.b16 %v672, %v669
    %v799 = vpack.c.b16 %v673, %v670
    %v800 = vpack.c.b16 %v677, %v674
    %v801 = vpack.c.b16 %v678, %v675
    %v802 = vpack.c.b16 %v679, %v676
    %v803 = vpack.c.b16 %v683, %v680
    %v804 = vpack.c.b16 %v684, %v681
    %v805 = vpack.c.b16 %v685, %v682
    %v806 = vpack.c.b16 %v689, %v686
    %v807 = vpack.c.b16 %v690, %v687
    %v808 = vpack.c.b16 %v691, %v688
    %v809 = vpack.c.b16 %v695, %v692
    %v810 = vpack.c.b16 %v696, %v693
    %v811 = vpack.c.b16 %v697, %v694
    %v812 = vpack.c.b16 %v701, %v698
    %v813 = vpack.c.b16 %v702, %v699
    %v814 = vpack.c.b16 %v703, %v700
    %v815 = vpack.c.b16 %v707, %v704
    %v816 = vpack.c.b16 %v708, %v705
    %v817 = vpack.c.b16 %v709, %v706
    %v927 = vsel %vm65, %v200, 0
    %v930 = vsel %vm65, %v205, 0
    %932 = vmatprep.subr.bf16.mxu0 %v711
    %933 = vmatpush1.bf16.msra.mxu0 %v710
    %934 = vmatprep.subr.bf16.mxu0 %v714
    %935 = vmatpush1.bf16.msra.mxu0 %v713
    %936 = vmatprep.subr.bf16.mxu0 %v717
    %937 = vmatpush1.bf16.msra.mxu0 %v716
    %938 = vmatprep.subr.bf16.mxu0 %v720
    %939 = vmatpush1.bf16.msra.mxu0 %v719
    %940 = vmatprep.subr.bf16.mxu0 %v723
    %941 = vmatpush1.bf16.msra.mxu0 %v722
    %942 = vmatprep.subr.bf16.mxu0 %v726
    %943 = vmatpush1.bf16.msra.mxu0 %v725
    %944 = vmatprep.subr.bf16.mxu0 %v729
    %945 = vmatpush1.bf16.msra.mxu0 %v728
    %946 = vmatprep.subr.bf16.mxu0 %v732
    %947 = vmatpush1.bf16.msra.mxu0 %v731
    %948 = vmatprep.subr.bf16.mxu0 %v735
    %949 = vmatpush1.bf16.msra.mxu0 %v734
    %950 = vmatprep.subr.bf16.mxu0 %v738
    %951 = vmatpush1.bf16.msra.mxu0 %v737
    %952 = vmatprep.subr.bf16.mxu0 %v741
    %953 = vmatpush1.bf16.msra.mxu0 %v740
    %954 = vmatprep.subr.bf16.mxu0 %v744
    %955 = vmatpush1.bf16.msra.mxu0 %v743
    %956 = vmatprep.subr.bf16.mxu0 %v747
    %957 = vmatpush1.bf16.msra.mxu0 %v746
    %958 = vmatprep.subr.bf16.mxu0 %v750
    %959 = vmatpush1.bf16.msra.mxu0 %v749
    %960 = vmatprep.subr.bf16.mxu0 %v753
    %961 = vmatpush1.bf16.msra.mxu0 %v752
    %962 = vmatprep.subr.bf16.mxu0 %v756
    %963 = vmatpush1.bf16.msra.mxu0 %v755
    %964 = vmatprep.mubr.bf16.mxu0 %v197
    %965 = vmatmul.mubr.bf16.gmra.mrb[0].mxu0 %v196
    %v966 = vpop.f32.mrb[0].mxu0
    %v967 = vadd.f32 0.0, %v966
    %v968 = vpop.f32.mrb[0].mxu0
    %v969 = vadd.f32 0.0, %v968
    %v970 = vpop.f32.mrb[0].mxu0
    %v971 = vadd.f32 0.0, %v970
    %v972 = vpop.f32.mrb[0].mxu0
    %v973 = vadd.f32 0.0, %v972
    %974 = vmatprep.mubr.bf16.mxu0 %v202
    %975 = vmatmul.mubr.bf16.gmra.mrb[0].mxu0 %v201
    %v976 = vpop.f32.mrb[0].mxu0
    %v977 = vadd.f32 0.0, %v976
    %v978 = vpop.f32.mrb[0].mxu0
    %v979 = vadd.f32 0.0, %v978
    %v980 = vpop.f32.mrb[0].mxu0
    %v981 = vadd.f32 0.0, %v980
    %v982 = vpop.f32.mrb[0].mxu0
    %v983 = vadd.f32 0.0, %v982
    %984 = vdwg.mxu0
    %985 = vmatprep.subr.bf16.mxu0 %v759
    %986 = vmatpush1.bf16.msra.mxu0 %v758
    %987 = vmatprep.subr.bf16.mxu0 %v762
    %988 = vmatpush1.bf16.msra.mxu0 %v761
    %989 = vmatprep.subr.bf16.mxu0 %v765
    %990 = vmatpush1.bf16.msra.mxu0 %v764
    %991 = vmatprep.subr.bf16.mxu0 %v768
    %992 = vmatpush1.bf16.msra.mxu0 %v767
    %993 = vmatprep.subr.bf16.mxu0 %v771
    %994 = vmatpush1.bf16.msra.mxu0 %v770
    %995 = vmatprep.subr.bf16.mxu0 %v774
    %996 = vmatpush1.bf16.msra.mxu0 %v773
    %997 = vmatprep.subr.bf16.mxu0 %v777
    %998 = vmatpush1.bf16.msra.mxu0 %v776
    %999 = vmatprep.subr.bf16.mxu0 %v780
    %1000 = vmatpush1.bf16.msra.mxu0 %v779
    %1001 = vmatprep.subr.bf16.mxu0 %v783
    %1002 = vmatpush1.bf16.msra.mxu0 %v782
    %1003 = vmatprep.subr.bf16.mxu0 %v786
    %1004 = vmatpush1.bf16.msra.mxu0 %v785
    %1005 = vmatprep.subr.bf16.mxu0 %v789
    %1006 = vmatpush1.bf16.msra.mxu0 %v788
    %1007 = vmatprep.subr.bf16.mxu0 %v792
    %1008 = vmatpush1.bf16.msra.mxu0 %v791
    %1009 = vmatprep.subr.bf16.mxu0 %v795
    %1010 = vmatpush1.bf16.msra.mxu0 %v794
    %1011 = vmatprep.subr.bf16.mxu0 %v798
    %1012 = vmatpush1.bf16.msra.mxu0 %v797
    %1013 = vmatprep.subr.bf16.mxu0 %v801
    %1014 = vmatpush1.bf16.msra.mxu0 %v800
    %1015 = vmatprep.subr.bf16.mxu0 %v804
    %1016 = vmatpush1.bf16.msra.mxu0 %v803
    %1017 = vmatprep.mubr.bf16.mxu0 %v199
    %1018 = vmatmul.mubr.bf16.gmra.mrb[0].mxu0 %v198
    %v1019 = vpop.f32.mrb[0].mxu0
    %v1020 = vadd.f32 %v967, %v1019
    %v1021 = vpop.f32.mrb[0].mxu0
    %v1022 = vadd.f32 %v969, %v1021
    %v1023 = vpop.f32.mrb[0].mxu0
    %v1024 = vadd.f32 %v971, %v1023
    %v1025 = vpop.f32.mrb[0].mxu0
    %v1026 = vadd.f32 %v973, %v1025
    %1027 = vmatprep.mubr.bf16.mxu0 %v204
    %1028 = vmatmul.mubr.bf16.gmra.mrb[0].mxu0 %v203
    %v1029 = vpop.f32.mrb[0].mxu0
    %v1030 = vadd.f32 %v977, %v1029
    %v1031 = vpop.f32.mrb[0].mxu0
    %v1032 = vadd.f32 %v979, %v1031
    %v1033 = vpop.f32.mrb[0].mxu0
    %v1034 = vadd.f32 %v981, %v1033
    %v1035 = vpop.f32.mrb[0].mxu0
    %v1036 = vadd.f32 %v983, %v1035
    %1037 = vdwg.mxu0
    %1038 = vmatprep.subr.bf16.mxu0 %v807
    %1039 = vmatpush1.bf16.msra.mxu0 %v806
    %1040 = vmatprep.subr.bf16.mxu0 %v810
    %1041 = vmatpush1.bf16.msra.mxu0 %v809
    %1042 = vmatprep.subr.bf16.mxu0 %v813
    %1043 = vmatpush1.bf16.msra.mxu0 %v812
    %1044 = vmatprep.subr.bf16.mxu0 %v816
    %1045 = vmatpush1.bf16.msra.mxu0 %v815
    %1046 = vmatprep.subr.bf16.mxu0 0
    %1047 = vmatpush1.bf16.msra.mxu0 0
    %1048 = vmatprep.subr.bf16.mxu0 0
    %1049 = vmatpush1.bf16.msra.mxu0 0
    %1050 = vmatprep.subr.bf16.mxu0 0
    %1051 = vmatpush1.bf16.msra.mxu0 0
    %1052 = vmatprep.subr.bf16.mxu0 0
    %1053 = vmatpush1.bf16.msra.mxu0 0
    %1054 = vmatprep.subr.bf16.mxu0 0
    %1055 = vmatpush1.bf16.msra.mxu0 0
    %1056 = vmatprep.subr.bf16.mxu0 0
    %1057 = vmatpush1.bf16.msra.mxu0 0
    %1058 = vmatprep.subr.bf16.mxu0 0
    %1059 = vmatpush1.bf16.msra.mxu0 0
    %1060 = vmatprep.subr.bf16.mxu0 0
    %1061 = vmatpush1.bf16.msra.mxu0 0
    %1062 = vmatprep.subr.bf16.mxu0 0
    %1063 = vmatpush1.bf16.msra.mxu0 0
    %1064 = vmatprep.subr.bf16.mxu0 0
    %1065 = vmatpush1.bf16.msra.mxu0 0
    %1066 = vmatprep.subr.bf16.mxu0 0
    %1067 = vmatpush1.bf16.msra.mxu0 0
    %1068 = vmatprep.subr.bf16.mxu0 0
    %1069 = vmatpush1.bf16.msra.mxu0 0
    %1070 = vmatprep.mubr.bf16.mxu0 0
    %1071 = vmatmul.mubr.bf16.gmra.mrb[0].mxu0 %v927
    %v1072 = vpop.f32.mrb[0].mxu0
    %v1073 = vadd.f32 %v1020, %v1072
    %v1074 = vpop.f32.mrb[0].mxu0
    %v1075 = vadd.f32 %v1022, %v1074
    %v1076 = vpop.f32.mrb[0].mxu0
    %v1077 = vadd.f32 %v1024, %v1076
    %v1078 = vpop.f32.mrb[0].mxu0
    %v1079 = vadd.f32 %v1026, %v1078
    %1080 = vmatprep.mubr.bf16.mxu0 0
    %1081 = vmatmul.mubr.bf16.gmra.mrb[0].mxu0 %v930
    %v1082 = vpop.f32.mrb[0].mxu0
    %v1083 = vadd.f32 %v1030, %v1082
    %v1084 = vpop.f32.mrb[0].mxu0
    %v1085 = vadd.f32 %v1032, %v1084
    %v1086 = vpop.f32.mrb[0].mxu0
    %v1087 = vadd.f32 %v1034, %v1086
    %v1088 = vpop.f32.mrb[0].mxu0
    %v1089 = vadd.f32 %v1036, %v1088
    %1090 = vdwg.mxu0
    %1091 = vmatprep.subr.bf16.mxu0 0
    %1092 = vmatpush1.bf16.msra.mxu0 %v712
    %1093 = vmatprep.subr.bf16.mxu0 0
    %1094 = vmatpush1.bf16.msra.mxu0 %v715
    %1095 = vmatprep.subr.bf16.mxu0 0
    %1096 = vmatpush1.bf16.msra.mxu0 %v718
    %1097 = vmatprep.subr.bf16.mxu0 0
    %1098 = vmatpush1.bf16.msra.mxu0 %v721
    %1099 = vmatprep.subr.bf16.mxu0 0
    %1100 = vmatpush1.bf16.msra.mxu0 %v724
    %1101 = vmatprep.subr.bf16.mxu0 0
    %1102 = vmatpush1.bf16.msra.mxu0 %v727
    %1103 = vmatprep.subr.bf16.mxu0 0
    %1104 = vmatpush1.bf16.msra.mxu0 %v730
    %1105 = vmatprep.subr.bf16.mxu0 0
    %1106 = vmatpush1.bf16.msra.mxu0 %v733
    %1107 = vmatprep.subr.bf16.mxu0 0
    %1108 = vmatpush1.bf16.msra.mxu0 %v736
    %1109 = vmatprep.subr.bf16.mxu0 0
    %1110 = vmatpush1.bf16.msra.mxu0 %v739
    %1111 = vmatprep.subr.bf16.mxu0 0
    %1112 = vmatpush1.bf16.msra.mxu0 %v742
    %1113 = vmatprep.subr.bf16.mxu0 0
    %1114 = vmatpush1.bf16.msra.mxu0 %v745
    %1115 = vmatprep.subr.bf16.mxu0 0
    %1116 = vmatpush1.bf16.msra.mxu0 %v748
    %1117 = vmatprep.subr.bf16.mxu0 0
    %1118 = vmatpush1.bf16.msra.mxu0 %v751
    %1119 = vmatprep.subr.bf16.mxu0 0
    %1120 = vmatpush1.bf16.msra.mxu0 %v754
    %1121 = vmatprep.subr.bf16.mxu0 0
    %1122 = vmatpush1.bf16.msra.mxu0 %v757
    %1123 = vmatprep.mubr.bf16.mxu0 %v197
    %1124 = vmatmul.mubr.bf16.gmra.mrb[0].mxu0 %v196
    %v1125 = vpop.f32.mrb[0].mxu0
    %v1126 = vadd.f32 0.0, %v1125
    %v1127 = vpop.f32.mrb[0].mxu0
    %v1128 = vpop.f32.mrb[0].mxu0
    %v1129 = vadd.f32 0.0, %v1128
    %v1130 = vpop.f32.mrb[0].mxu0
    %1131 = vmatprep.mubr.bf16.mxu0 %v202
    %1132 = vmatmul.mubr.bf16.gmra.mrb[0].mxu0 %v201
    %v1133 = vpop.f32.mrb[0].mxu0
    %v1134 = vadd.f32 0.0, %v1133
    %v1135 = vpop.f32.mrb[0].mxu0
    %v1136 = vpop.f32.mrb[0].mxu0
    %v1137 = vadd.f32 0.0, %v1136
    %v1138 = vpop.f32.mrb[0].mxu0
    %1139 = vdwg.mxu0
    %1140 = vmatprep.subr.bf16.mxu0 0
    %1141 = vmatpush1.bf16.msra.mxu0 %v760
    %1142 = vmatprep.subr.bf16.mxu0 0
    %1143 = vmatpush1.bf16.msra.mxu0 %v763
    %1144 = vmatprep.subr.bf16.mxu0 0
    %1145 = vmatpush1.bf16.msra.mxu0 %v766
    %1146 = vmatprep.subr.bf16.mxu0 0
    %1147 = vmatpush1.bf16.msra.mxu0 %v769
    %1148 = vmatprep.subr.bf16.mxu0 0
    %1149 = vmatpush1.bf16.msra.mxu0 %v772
    %1150 = vmatprep.subr.bf16.mxu0 0
    %1151 = vmatpush1.bf16.msra.mxu0 %v775
    %1152 = vmatprep.subr.bf16.mxu0 0
    %1153 = vmatpush1.bf16.msra.mxu0 %v778
    %1154 = vmatprep.subr.bf16.mxu0 0
    %1155 = vmatpush1.bf16.msra.mxu0 %v781
    %1156 = vmatprep.subr.bf16.mxu0 0
    %1157 = vmatpush1.bf16.msra.mxu0 %v784
    %1158 = vmatprep.subr.bf16.mxu0 0
    %1159 = vmatpush1.bf16.msra.mxu0 %v787
    %1160 = vmatprep.subr.bf16.mxu0 0
    %1161 = vmatpush1.bf16.msra.mxu0 %v790
    %1162 = vmatprep.subr.bf16.mxu0 0
    %1163 = vmatpush1.bf16.msra.mxu0 %v793
    %1164 = vmatprep.subr.bf16.mxu0 0
    %1165 = vmatpush1.bf16.msra.mxu0 %v796
    %1166 = vmatprep.subr.bf16.mxu0 0
    %1167 = vmatpush1.bf16.msra.mxu0 %v799
    %1168 = vmatprep.subr.bf16.mxu0 0
    %1169 = vmatpush1.bf16.msra.mxu0 %v802
    %1170 = vmatprep.subr.bf16.mxu0 0
    %1171 = vmatpush1.bf16.msra.mxu0 %v805
    %1172 = vmatprep.mubr.bf16.mxu0 %v199
    %1173 = vmatmul.mubr.bf16.gmra.mrb[0].mxu0 %v198
    %v1174 = vpop.f32.mrb[0].mxu0
    %v1175 = vadd.f32 %v1126, %v1174
    %v1176 = vpop.f32.mrb[0].mxu0
    %v1177 = vpop.f32.mrb[0].mxu0
    %v1178 = vadd.f32 %v1129, %v1177
    %v1179 = vpop.f32.mrb[0].mxu0
    %1180 = vmatprep.mubr.bf16.mxu0 %v204
    %1181 = vmatmul.mubr.bf16.gmra.mrb[0].mxu0 %v203
    %v1182 = vpop.f32.mrb[0].mxu0
    %v1183 = vadd.f32 %v1134, %v1182
    %v1184 = vpop.f32.mrb[0].mxu0
    %v1185 = vpop.f32.mrb[0].mxu0
    %v1186 = vadd.f32 %v1137, %v1185
    %v1187 = vpop.f32.mrb[0].mxu0
    %1188 = vdwg.mxu0
    %1189 = vmatprep.subr.bf16.mxu0 0
    %1190 = vmatpush1.bf16.msra.mxu0 %v808
    %1191 = vmatprep.subr.bf16.mxu0 0
    %1192 = vmatpush1.bf16.msra.mxu0 %v811
    %1193 = vmatprep.subr.bf16.mxu0 0
    %1194 = vmatpush1.bf16.msra.mxu0 %v814
    %1195 = vmatprep.subr.bf16.mxu0 0
    %1196 = vmatpush1.bf16.msra.mxu0 %v817
    %1197 = vmatprep.subr.bf16.mxu0 0
    %1198 = vmatpush1.bf16.msra.mxu0 0
    %1199 = vmatprep.subr.bf16.mxu0 0
    %1200 = vmatpush1.bf16.msra.mxu0 0
    %1201 = vmatprep.subr.bf16.mxu0 0
    %1202 = vmatpush1.bf16.msra.mxu0 0
    %1203 = vmatprep.subr.bf16.mxu0 0
    %1204 = vmatpush1.bf16.msra.mxu0 0
    %1205 = vmatprep.subr.bf16.mxu0 0
    %1206 = vmatpush1.bf16.msra.mxu0 0
    %1207 = vmatprep.subr.bf16.mxu0 0
    %1208 = vmatpush1.bf16.msra.mxu0 0
    %1209 = vmatprep.subr.bf16.mxu0 0
    %1210 = vmatpush1.bf16.msra.mxu0 0
    %1211 = vmatprep.subr.bf16.mxu0 0
    %1212 = vmatpush1.bf16.msra.mxu0 0
    %1213 = vmatprep.subr.bf16.mxu0 0
    %1214 = vmatpush1.bf16.msra.mxu0 0
    %1215 = vmatprep.subr.bf16.mxu0 0
    %1216 = vmatpush1.bf16.msra.mxu0 0
    %1217 = vmatprep.subr.bf16.mxu0 0
    %1218 = vmatpush1.bf16.msra.mxu0 0
    %1219 = vmatprep.subr.bf16.mxu0 0
    %1220 = vmatpush1.bf16.msra.mxu0 0
    %1221 = vmatprep.mubr.bf16.mxu0 0
    %1222 = vmatmul.mubr.bf16.gmra.mrb[0].mxu0 %v927
    %v1223 = vpop.f32.mrb[0].mxu0
    %v1224 = vadd.f32 %v1175, %v1223
    %v1225 = vpop.f32.mrb[0].mxu0
    %v1226 = vpop.f32.mrb[0].mxu0
    %v1227 = vadd.f32 %v1178, %v1226
    %v1228 = vpop.f32.mrb[0].mxu0
    %1229 = vmatprep.mubr.bf16.mxu0 0
    %1230 = vmatmul.mubr.bf16.gmra.mrb[0].mxu0 %v930
    %v1231 = vpop.f32.mrb[0].mxu0
    %v1232 = vadd.f32 %v1183, %v1231
    %v1233 = vpop.f32.mrb[0].mxu0
    %v1234 = vpop.f32.mrb[0].mxu0
    %v1235 = vadd.f32 %v1186, %v1234
    %v1236 = vpop.f32.mrb[0].mxu0
    %1237 = vdwg.mxu0
    %1246 = vrot.lane.b32.xlu0 %v1073, 44
    %v1247 = vpop.permute.xlu0 %1246
    %1248 = vrot.lane.b32.xlu0 %v1075, 44
    %v1249 = vpop.permute.xlu0 %1248
    %1250 = vrot.lane.b32.xlu0 %v1077, 44
    %v1251 = vpop.permute.xlu0 %1250
    %1252 = vrot.lane.b32.xlu0 %v1079, 44
    %v1253 = vpop.permute.xlu0 %1252
    %1254 = vrot.lane.b32.xlu0 %v1083, 44
    %v1255 = vpop.permute.xlu0 %1254
    %1256 = vrot.lane.b32.xlu0 %v1085, 44
    %v1257 = vpop.permute.xlu0 %1256
    %1258 = vrot.lane.b32.xlu0 %v1087, 44
    %v1259 = vpop.permute.xlu0 %1258
    %1260 = vrot.lane.b32.xlu0 %v1089, 44
    %v1261 = vpop.permute.xlu0 %1260
    %vm1262 = vcmask 359424
    %v1263 = vsel %vm1262, %v1247, %v1249
    %v1264 = vsel %vm1262, %v1251, %v1253
    %v1265 = vsel %vm1262, %v1255, %v1257
    %v1266 = vsel %vm1262, %v1259, %v1261
    %v1271 = vmax.f32 %v1073, %v1263
    %v1272 = vmax.f32 %v1077, %v1264
    %v1273 = vmax.f32 %v1083, %v1265
    %v1274 = vmax.f32 %v1087, %v1266
    %1279 = vrot.lane.b32.xlu0 %v1224, 44
    %v1280 = vpop.permute.xlu0 %1279
    %1281 = vrot.lane.b32.xlu0 %v1227, 44
    %v1282 = vpop.permute.xlu0 %1281
    %1283 = vrot.lane.b32.xlu0 %v1232, 44
    %v1284 = vpop.permute.xlu0 %1283
    %1285 = vrot.lane.b32.xlu0 %v1235, 44
    %v1286 = vpop.permute.xlu0 %1285
    %v1287 = vsel %vm1262, %v1249, %v1280
    %v1288 = vsel %vm1262, %v1253, %v1282
    %v1289 = vsel %vm1262, %v1257, %v1284
    %v1290 = vsel %vm1262, %v1261, %v1286
    %v1295 = vmax.f32 %v1075, %v1287
    %v1296 = vmax.f32 %v1079, %v1288
    %v1297 = vmax.f32 %v1085, %v1289
    %v1298 = vmax.f32 %v1089, %v1290
    %1303 = vrot.lane.b32.xlu0 %v1295, 88
    %v1304 = vpop.permute.xlu0 %1303
    %1305 = vrot.lane.b32.xlu0 %v1296, 88
    %v1306 = vpop.permute.xlu0 %1305
    %1307 = vrot.lane.b32.xlu0 %v1297, 88
    %v1308 = vpop.permute.xlu0 %1307
    %1309 = vrot.lane.b32.xlu0 %v1298, 88
    %v1310 = vpop.permute.xlu0 %1309
    %v1315 = vmax.f32 %v1271, %v1304
    %v1316 = vmax.f32 %v1272, %v1306
    %v1317 = vmax.f32 %v1273, %v1308
    %v1318 = vmax.f32 %v1274, %v1310
    %v1319 = vld [vmem:[%s2] sm:$0x1]
    %v1321 = vlaneseq
    %v1322 = vshrl.u32 %v1321, 7
    %v1323 = vsub.s32 0, %v1322
    %v1324 = vrot.slane %v1319, %v1323
    %v1326 = vadd.f32 %v1315, %v1324
    %v1327 = vadd.f32 %v1316, %v1324
    %v1328 = vadd.f32 %v1317, %v1324
    %v1329 = vadd.f32 %v1318, %v1324
    %v1330 = vmax.f32 %v1326, 0.0
    %v1331 = vmax.f32 %v1327, 0.0
    %v1332 = vmax.f32 %v1328, 0.0
    %v1333 = vmax.f32 %v1329, 0.0
    %vm1336 = vcmask 1041408
    %v1337 = vrot.slane %v1331, 6
    %v1338 = vrot.slane %v1332, 6
    %v1339 = vsel %vm1336, %v1337, %v1338
    %1340 = vrot.lane.b32.xlu0 %v1339, 84
    %v1341 = vpop.permute.xlu0 %1340
    %v1344 = vrot.slane %v1330, 1
    %1345 = vrot.lane.b32.xlu0 %v1344, 40
    %v1346 = vpop.permute.xlu0 %1345
    %vm1348 = vcmask 1040384
    %v1349 = vrot.slane %v1331, 7
    %v1350 = vrot.slane %v1332, 7
    %v1351 = vsel %vm1348, %v1349, %v1350
    %1352 = vrot.lane.b32.xlu0 %v1351, 124
    %v1353 = vpop.permute.xlu0 %1352
    %v1355 = vrot.slane %v1330, 2
    %1356 = vrot.lane.b32.xlu0 %v1355, 80
    %v1357 = vpop.permute.xlu0 %1356
    %1359 = vrot.lane.b32.xlu0 %v1332, 36
    %v1360 = vpop.permute.xlu0 %1359
    %vm1362 = vcmask 687104
    %v1363 = vsel %vm1362, %v1330, %v1341
    %vm1364 = vcmask 326656
    %v1365 = vsel %vm1364, %v1341, %v1346
    %vm1366 = vcmask 1014784
    %v1367 = vsel %vm1366, %v1365, %v1353
    %vm1368 = vcmask 654336
    %v1369 = vsel %vm1368, %v1353, %v1357
    %vm1370 = vcmask 293888
    %v1371 = vsel %vm1370, %v1357, %v1360
    %v1373 = vrot.slane %v1333, 6
    %v1374 = vsel %vm1336, %v1338, %v1373
    %1375 = vrot.lane.b32.xlu0 %v1338, 84
    %v1376 = vpop.permute.xlu0 %1375
    %1377 = vrot.lane.b32.xlu0 %v1374, 84
    %v1378 = vpop.permute.xlu0 %1377
    %v1381 = vrot.slane %v1331, 1
    %1382 = vrot.lane.b32.xlu0 %v1381, 40
    %v1383 = vpop.permute.xlu0 %1382
    %v1385 = vrot.slane %v1333, 7
    %v1386 = vsel %vm1348, %v1350, %v1385
    %1387 = vrot.lane.b32.xlu0 %v1350, 124
    %v1388 = vpop.permute.xlu0 %1387
    %1389 = vrot.lane.b32.xlu0 %v1386, 124
    %v1390 = vpop.permute.xlu0 %1389
    %v1393 = vrot.slane %v1331, 2
    %1394 = vrot.lane.b32.xlu0 %v1393, 80
    %v1395 = vpop.permute.xlu0 %1394
    %1397 = vrot.lane.b32.xlu0 %v1333, 36
    %v1398 = vpop.permute.xlu0 %1397
    %v1400 = vsel %vm1362, %v1330, %v1376
    %v1401 = vsel %vm1362, %v1331, %v1378
    %v1402 = vsel %vm1364, %v1376, %v1383
    %v1403 = vsel %vm1364, %v1378, %v1383
    %v1404 = vsel %vm1366, %v1402, %v1388
    %v1405 = vsel %vm1366, %v1403, %v1390
    %v1406 = vsel %vm1368, %v1388, %v1395
    %v1407 = vsel %vm1368, %v1390, %v1395
    %v1408 = vsel %vm1370, %v1395, %v1360
    %v1409 = vsel %vm1370, %v1395, %v1398
    %v1418 = vrot.slane %v1400, 2
    %v1419 = vrot.slane %v1401, 2
    %v1420 = vsel %vm184, %v1418, %v1419
    %v1421 = vrot.slane %v1404, 2
    %v1422 = vrot.slane %v1405, 2
    %v1423 = vsel %vm184, %v1421, %v1422
    %v1424 = vrot.slane %v1406, 2
    %v1425 = vrot.slane %v1407, 2
    %v1426 = vsel %vm184, %v1424, %v1425
    %v1427 = vrot.slane %v1408, 2
    %v1428 = vrot.slane %v1409, 2
    %v1429 = vsel %vm184, %v1427, %v1428
    %v1438 = vsel %vm190, %v1363, %v1420
    %v1439 = vsel %vm190, %v1367, %v1423
    %v1440 = vsel %vm190, %v1369, %v1426
    %v1441 = vsel %vm190, %v1371, %v1429
    %v1442 = vpack.c.bf16 %v1419, %v1438
    %v1443 = vpack.c.bf16 %v1422, %v1439
    %v1444 = vpack.c.bf16 %v1425, %v1440
    %v1445 = vpack.c.bf16 %v1428, %v1441
    %v1446 = vld [vmem:[%s3] sm:$0xff]
    %v1447 = vld [vmem:[%s3 + $0x8] sm:$0xf]
    %v1448 = vld [vmem:[%s3 + $0xc] sm:$0xff]
    %v1449 = vld [vmem:[%s3 + $0x14] sm:$0xf]
    %v1450 = vld [vmem:[%s3 + $0x18] sm:$0xff]
    %v1451 = vld [vmem:[%s3 + $0x20] sm:$0xf]
    %v1452 = vld [vmem:[%s3 + $0x24] sm:$0xff]
    %v1453 = vld [vmem:[%s3 + $0x2c] sm:$0xf]
    %v1454 = vld [vmem:[%s3 + $0x30] sm:$0xff]
    %v1455 = vld [vmem:[%s3 + $0x38] sm:$0xf]
    %v1456 = vld [vmem:[%s3 + $0x3c] sm:$0xff]
    %v1457 = vld [vmem:[%s3 + $0x44] sm:$0xf]
    %v1458 = vld [vmem:[%s3 + $0x48] sm:$0xff]
    %v1459 = vld [vmem:[%s3 + $0x50] sm:$0xf]
    %v1460 = vld [vmem:[%s3 + $0x54] sm:$0xff]
    %v1461 = vld [vmem:[%s3 + $0x5c] sm:$0xf]
    %v1462 = vld [vmem:[%s3 + $0x60] sm:$0xff]
    %v1463 = vld [vmem:[%s3 + $0x68] sm:$0xf]
    %v1464 = vld [vmem:[%s3 + $0x6c] sm:$0xff]
    %v1465 = vld [vmem:[%s3 + $0x74] sm:$0xf]
    %v1466 = vld [vmem:[%s3 + $0x78] sm:$0xff]
    %v1467 = vld [vmem:[%s3 + $0x80] sm:$0xf]
    %v1468 = vld [vmem:[%s3 + $0x84] sm:$0xff]
    %v1469 = vld [vmem:[%s3 + $0x8c] sm:$0xf]
    %v1470 = vld [vmem:[%s3 + $0x90] sm:$0xff]
    %v1471 = vld [vmem:[%s3 + $0x98] sm:$0xf]
    %v1472 = vld [vmem:[%s3 + $0x9c] sm:$0xff]
    %v1473 = vld [vmem:[%s3 + $0xa4] sm:$0xf]
    %v1474 = vld [vmem:[%s3 + $0xa8] sm:$0xff]
    %v1475 = vld [vmem:[%s3 + $0xb0] sm:$0xf]
    %v1476 = vld [vmem:[%s3 + $0xb4] sm:$0xff]
    %v1477 = vld [vmem:[%s3 + $0xbc] sm:$0xf]
    %v1478 = vld [vmem:[%s3 + $0xc0] sm:$0xff]
    %v1479 = vld [vmem:[%s3 + $0xc8] sm:$0xf]
    %v1480 = vld [vmem:[%s3 + $0xcc] sm:$0xff]
    %v1481 = vld [vmem:[%s3 + $0xd4] sm:$0xf]
    %v1482 = vld [vmem:[%s3 + $0xd8] sm:$0xff]
    %v1483 = vld [vmem:[%s3 + $0xe0] sm:$0xf]
    %v1484 = vld [vmem:[%s3 + $0xe4] sm:$0xff]
    %v1485 = vld [vmem:[%s3 + $0xec] sm:$0xf]
    %v1486 = vld [vmem:[%s3 + $0xf0] sm:$0xff]
    %v1487 = vld [vmem:[%s3 + $0xf8] sm:$0xf]
    %v1488 = vld [vmem:[%s3 + $0xfc] sm:$0xff]
    %v1489 = vld [vmem:[%s3 + $0x104] sm:$0xf]
    %v1490 = vld [vmem:[%s3 + $0x108] sm:$0xff]
    %v1491 = vld [vmem:[%s3 + $0x110] sm:$0xf]
    %v1492 = vld [vmem:[%s3 + $0x114] sm:$0xff]
    %v1493 = vld [vmem:[%s3 + $0x11c] sm:$0xf]
    %v1494 = vld [vmem:[%s3 + $0x120] sm:$0xff]
    %v1495 = vld [vmem:[%s3 + $0x128] sm:$0xf]
    %v1496 = vld [vmem:[%s3 + $0x12c] sm:$0xff]
    %v1497 = vld [vmem:[%s3 + $0x134] sm:$0xf]
    %v1498 = vld [vmem:[%s3 + $0x138] sm:$0xff]
    %v1499 = vld [vmem:[%s3 + $0x140] sm:$0xf]
    %v1500 = vld [vmem:[%s3 + $0x144] sm:$0xff]
    %v1501 = vld [vmem:[%s3 + $0x14c] sm:$0xf]
    %v1502 = vld [vmem:[%s3 + $0x150] sm:$0xff]
    %v1503 = vld [vmem:[%s3 + $0x158] sm:$0xf]
    %v1504 = vld [vmem:[%s3 + $0x15c] sm:$0xff]
    %v1505 = vld [vmem:[%s3 + $0x164] sm:$0xf]
    %v1506 = vld [vmem:[%s3 + $0x168] sm:$0xff]
    %v1507 = vld [vmem:[%s3 + $0x170] sm:$0xf]
    %v1508 = vld [vmem:[%s3 + $0x174] sm:$0xff]
    %v1509 = vld [vmem:[%s3 + $0x17c] sm:$0xf]
    %v1510 = vld [vmem:[%s3 + $0x180] sm:$0xff]
    %v1511 = vld [vmem:[%s3 + $0x188] sm:$0xf]
    %v1512 = vld [vmem:[%s3 + $0x18c] sm:$0xff]
    %v1513 = vld [vmem:[%s3 + $0x194] sm:$0xf]
    %v1514 = vld [vmem:[%s3 + $0x198] sm:$0xff]
    %v1515 = vld [vmem:[%s3 + $0x1a0] sm:$0xf]
    %v1516 = vld [vmem:[%s3 + $0x1a4] sm:$0xff]
    %v1517 = vld [vmem:[%s3 + $0x1ac] sm:$0xf]
    %v1518 = vld [vmem:[%s3 + $0x1b0] sm:$0xff]
    %v1519 = vld [vmem:[%s3 + $0x1b8] sm:$0xf]
    %v1520 = vld [vmem:[%s3 + $0x1bc] sm:$0xff]
    %v1521 = vld [vmem:[%s3 + $0x1c4] sm:$0xf]
    %v1522 = vld [vmem:[%s3 + $0x1c8] sm:$0xff]
    %v1523 = vld [vmem:[%s3 + $0x1d0] sm:$0xf]
    %v1524 = vld [vmem:[%s3 + $0x1d4] sm:$0xff]
    %v1525 = vld [vmem:[%s3 + $0x1dc] sm:$0xf]
    %v1526 = vld [vmem:[%s3 + $0x1e0] sm:$0xff]
    %v1527 = vld [vmem:[%s3 + $0x1e8] sm:$0xf]
    %v1528 = vld [vmem:[%s3 + $0x1ec] sm:$0xff]
    %v1529 = vld [vmem:[%s3 + $0x1f4] sm:$0xf]
    %v1530 = vld [vmem:[%s3 + $0x1f8] sm:$0xff]
    %v1531 = vld [vmem:[%s3 + $0x200] sm:$0xf]
    %v1532 = vld [vmem:[%s3 + $0x204] sm:$0xff]
    %v1533 = vld [vmem:[%s3 + $0x20c] sm:$0xf]
    %v1534 = vld [vmem:[%s3 + $0x210] sm:$0xff]
    %v1535 = vld [vmem:[%s3 + $0x218] sm:$0xf]
    %v1536 = vld [vmem:[%s3 + $0x21c] sm:$0xff]
    %v1537 = vld [vmem:[%s3 + $0x224] sm:$0xf]
    %v1538 = vld [vmem:[%s3 + $0x228] sm:$0xff]
    %v1539 = vld [vmem:[%s3 + $0x230] sm:$0xf]
    %v1540 = vld [vmem:[%s3 + $0x234] sm:$0xff]
    %v1541 = vld [vmem:[%s3 + $0x23c] sm:$0xf]
    %v1542 = vld [vmem:[%s3 + $0x240] sm:$0xff]
    %v1543 = vld [vmem:[%s3 + $0x248] sm:$0xf]
    %v1544 = vld [vmem:[%s3 + $0x24c] sm:$0xff]
    %v1545 = vld [vmem:[%s3 + $0x254] sm:$0xf]
    %v1546 = vld [vmem:[%s3 + $0x258] sm:$0xff]
    %v1547 = vld [vmem:[%s3 + $0x260] sm:$0xf]
    %v1548 = vld [vmem:[%s3 + $0x264] sm:$0xff]
    %v1549 = vld [vmem:[%s3 + $0x26c] sm:$0xf]
    %v1550 = vld [vmem:[%s3 + $0x270] sm:$0xff]
    %v1551 = vld [vmem:[%s3 + $0x278] sm:$0xf]
    %v1552 = vld [vmem:[%s3 + $0x27c] sm:$0xff]
    %v1553 = vld [vmem:[%s3 + $0x284] sm:$0xf]
    %v1554 = vld [vmem:[%s3 + $0x288] sm:$0xff]
    %v1555 = vld [vmem:[%s3 + $0x290] sm:$0xf]
    %v1556 = vld [vmem:[%s3 + $0x294] sm:$0xff]
    %v1557 = vld [vmem:[%s3 + $0x29c] sm:$0xf]
    %v1558 = vld [vmem:[%s3 + $0x2a0] sm:$0xff]
    %v1559 = vld [vmem:[%s3 + $0x2a8] sm:$0xf]
    %v1560 = vld [vmem:[%s3 + $0x2ac] sm:$0xff]
    %v1561 = vld [vmem:[%s3 + $0x2b4] sm:$0xf]
    %v1562 = vld [vmem:[%s3 + $0x2b8] sm:$0xff]
    %v1563 = vld [vmem:[%s3 + $0x2c0] sm:$0xf]
    %v1564 = vld [vmem:[%s3 + $0x2c4] sm:$0xff]
    %v1565 = vld [vmem:[%s3 + $0x2cc] sm:$0xf]
    %v1566 = vld [vmem:[%s3 + $0x2d0] sm:$0xff]
    %v1567 = vld [vmem:[%s3 + $0x2d8] sm:$0xf]
    %v1568 = vld [vmem:[%s3 + $0x2dc] sm:$0xff]
    %v1569 = vld [vmem:[%s3 + $0x2e4] sm:$0xf]
    %v1570 = vld [vmem:[%s3 + $0x2e8] sm:$0xff]
    %v1571 = vld [vmem:[%s3 + $0x2f0] sm:$0xf]
    %v1698 = vunpack.c.l.b16 %v1446
    %v1699 = vunpack.c.h.b16 %v1446
    %v1700 = vunpack.c.l.b16 %v1447
    %v1701 = vunpack.c.l.b16 %v1448
    %v1702 = vunpack.c.h.b16 %v1448
    %v1703 = vunpack.c.l.b16 %v1449
    %v1704 = vunpack.c.l.b16 %v1450
    %v1705 = vunpack.c.h.b16 %v1450
    %v1706 = vunpack.c.l.b16 %v1451
    %v1707 = vunpack.c.l.b16 %v1452
    %v1708 = vunpack.c.h.b16 %v1452
    %v1709 = vunpack.c.l.b16 %v1453
    %v1710 = vunpack.c.l.b16 %v1454
    %v1711 = vunpack.c.h.b16 %v1454
    %v1712 = vunpack.c.l.b16 %v1455
    %v1713 = vunpack.c.l.b16 %v1456
    %v1714 = vunpack.c.h.b16 %v1456
    %v1715 = vunpack.c.l.b16 %v1457
    %v1716 = vunpack.c.l.b16 %v1458
    %v1717 = vunpack.c.h.b16 %v1458
    %v1718 = vunpack.c.l.b16 %v1459
    %v1719 = vunpack.c.l.b16 %v1460
    %v1720 = vunpack.c.h.b16 %v1460
    %v1721 = vunpack.c.l.b16 %v1461
    %v1722 = vunpack.c.l.b16 %v1462
    %v1723 = vunpack.c.h.b16 %v1462
    %v1724 = vunpack.c.l.b16 %v1463
    %v1725 = vunpack.c.l.b16 %v1464
    %v1726 = vunpack.c.h.b16 %v1464
    %v1727 = vunpack.c.l.b16 %v1465
    %v1728 = vunpack.c.l.b16 %v1466
    %v1729 = vunpack.c.h.b16 %v1466
    %v1730 = vunpack.c.l.b16 %v1467
    %v1731 = vunpack.c.l.b16 %v1468
    %v1732 = vunpack.c.h.b16 %v1468
    %v1733 = vunpack.c.l.b16 %v1469
    %v1734 = vunpack.c.l.b16 %v1470
    %v1735 = vunpack.c.h.b16 %v1470
    %v1736 = vunpack.c.l.b16 %v1471
    %v1737 = vunpack.c.l.b16 %v1472
    %v1738 = vunpack.c.h.b16 %v1472
    %v1739 = vunpack.c.l.b16 %v1473
    %v1740 = vunpack.c.l.b16 %v1474
    %v1741 = vunpack.c.h.b16 %v1474
    %v1742 = vunpack.c.l.b16 %v1475
    %v1743 = vunpack.c.l.b16 %v1476
    %v1744 = vunpack.c.h.b16 %v1476
    %v1745 = vunpack.c.l.b16 %v1477
    %v1746 = vunpack.c.l.b16 %v1478
    %v1747 = vunpack.c.h.b16 %v1478
    %v1748 = vunpack.c.l.b16 %v1479
    %v1749 = vunpack.c.l.b16 %v1480
    %v1750 = vunpack.c.h.b16 %v1480
    %v1751 = vunpack.c.l.b16 %v1481
    %v1752 = vunpack.c.l.b16 %v1482
    %v1753 = vunpack.c.h.b16 %v1482
    %v1754 = vunpack.c.l.b16 %v1483
    %v1755 = vunpack.c.l.b16 %v1484
    %v1756 = vunpack.c.h.b16 %v1484
    %v1757 = vunpack.c.l.b16 %v1485
    %v1758 = vunpack.c.l.b16 %v1486
    %v1759 = vunpack.c.h.b16 %v1486
    %v1760 = vunpack.c.l.b16 %v1487
    %v1761 = vunpack.c.l.b16 %v1488
    %v1762 = vunpack.c.h.b16 %v1488
    %v1763 = vunpack.c.l.b16 %v1489
    %v1764 = vunpack.c.l.b16 %v1490
    %v1765 = vunpack.c.h.b16 %v1490
    %v1766 = vunpack.c.l.b16 %v1491
    %v1767 = vunpack.c.l.b16 %v1492
    %v1768 = vunpack.c.h.b16 %v1492
    %v1769 = vunpack.c.l.b16 %v1493
    %v1770 = vunpack.c.l.b16 %v1494
    %v1771 = vunpack.c.h.b16 %v1494
    %v1772 = vunpack.c.l.b16 %v1495
    %v1773 = vunpack.c.l.b16 %v1496
    %v1774 = vunpack.c.h.b16 %v1496
    %v1775 = vunpack.c.l.b16 %v1497
    %v1776 = vunpack.c.l.b16 %v1498
    %v1777 = vunpack.c.h.b16 %v1498
    %v1778 = vunpack.c.l.b16 %v1499
    %v1779 = vunpack.c.l.b16 %v1500
    %v1780 = vunpack.c.h.b16 %v1500
    %v1781 = vunpack.c.l.b16 %v1501
    %v1782 = vunpack.c.l.b16 %v1502
    %v1783 = vunpack.c.h.b16 %v1502
    %v1784 = vunpack.c.l.b16 %v1503
    %v1785 = vunpack.c.l.b16 %v1504
    %v1786 = vunpack.c.h.b16 %v1504
    %v1787 = vunpack.c.l.b16 %v1505
    %v1788 = vunpack.c.l.b16 %v1506
    %v1789 = vunpack.c.h.b16 %v1506
    %v1790 = vunpack.c.l.b16 %v1507
    %v1791 = vunpack.c.l.b16 %v1508
    %v1792 = vunpack.c.h.b16 %v1508
    %v1793 = vunpack.c.l.b16 %v1509
    %v1794 = vunpack.c.l.b16 %v1510
    %v1795 = vunpack.c.h.b16 %v1510
    %v1796 = vunpack.c.l.b16 %v1511
    %v1797 = vunpack.c.l.b16 %v1512
    %v1798 = vunpack.c.h.b16 %v1512
    %v1799 = vunpack.c.l.b16 %v1513
    %v1800 = vunpack.c.l.b16 %v1514
    %v1801 = vunpack.c.h.b16 %v1514
    %v1802 = vunpack.c.l.b16 %v1515
    %v1803 = vunpack.c.l.b16 %v1516
    %v1804 = vunpack.c.h.b16 %v1516
    %v1805 = vunpack.c.l.b16 %v1517
    %v1806 = vunpack.c.l.b16 %v1518
    %v1807 = vunpack.c.h.b16 %v1518
    %v1808 = vunpack.c.l.b16 %v1519
    %v1809 = vunpack.c.l.b16 %v1520
    %v1810 = vunpack.c.h.b16 %v1520
    %v1811 = vunpack.c.l.b16 %v1521
    %v1812 = vunpack.c.l.b16 %v1522
    %v1813 = vunpack.c.h.b16 %v1522
    %v1814 = vunpack.c.l.b16 %v1523
    %v1815 = vunpack.c.l.b16 %v1524
    %v1816 = vunpack.c.h.b16 %v1524
    %v1817 = vunpack.c.l.b16 %v1525
    %v1818 = vunpack.c.l.b16 %v1526
    %v1819 = vunpack.c.h.b16 %v1526
    %v1820 = vunpack.c.l.b16 %v1527
    %v1821 = vunpack.c.l.b16 %v1528
    %v1822 = vunpack.c.h.b16 %v1528
    %v1823 = vunpack.c.l.b16 %v1529
    %v1824 = vunpack.c.l.b16 %v1530
    %v1825 = vunpack.c.h.b16 %v1530
    %v1826 = vunpack.c.l.b16 %v1531
    %v1827 = vunpack.c.l.b16 %v1532
    %v1828 = vunpack.c.h.b16 %v1532
    %v1829 = vunpack.c.l.b16 %v1533
    %v1830 = vunpack.c.l.b16 %v1534
    %v1831 = vunpack.c.h.b16 %v1534
    %v1832 = vunpack.c.l.b16 %v1535
    %v1833 = vunpack.c.l.b16 %v1536
    %v1834 = vunpack.c.h.b16 %v1536
    %v1835 = vunpack.c.l.b16 %v1537
    %v1836 = vunpack.c.l.b16 %v1538
    %v1837 = vunpack.c.h.b16 %v1538
    %v1838 = vunpack.c.l.b16 %v1539
    %v1839 = vunpack.c.l.b16 %v1540
    %v1840 = vunpack.c.h.b16 %v1540
    %v1841 = vunpack.c.l.b16 %v1541
    %v1842 = vunpack.c.l.b16 %v1542
    %v1843 = vunpack.c.h.b16 %v1542
    %v1844 = vunpack.c.l.b16 %v1543
    %v1845 = vunpack.c.l.b16 %v1544
    %v1846 = vunpack.c.h.b16 %v1544
    %v1847 = vunpack.c.l.b16 %v1545
    %v1848 = vunpack.c.l.b16 %v1546
    %v1849 = vunpack.c.h.b16 %v1546
    %v1850 = vunpack.c.l.b16 %v1547
    %v1851 = vunpack.c.l.b16 %v1548
    %v1852 = vunpack.c.h.b16 %v1548
    %v1853 = vunpack.c.l.b16 %v1549
    %v1854 = vunpack.c.l.b16 %v1550
    %v1855 = vunpack.c.h.b16 %v1550
    %v1856 = vunpack.c.l.b16 %v1551
    %v1857 = vunpack.c.l.b16 %v1552
    %v1858 = vunpack.c.h.b16 %v1552
    %v1859 = vunpack.c.l.b16 %v1553
    %v1860 = vunpack.c.l.b16 %v1554
    %v1861 = vunpack.c.h.b16 %v1554
    %v1862 = vunpack.c.l.b16 %v1555
    %v1863 = vunpack.c.l.b16 %v1556
    %v1864 = vunpack.c.h.b16 %v1556
    %v1865 = vunpack.c.l.b16 %v1557
    %v1866 = vunpack.c.l.b16 %v1558
    %v1867 = vunpack.c.h.b16 %v1558
    %v1868 = vunpack.c.l.b16 %v1559
    %v1869 = vunpack.c.l.b16 %v1560
    %v1870 = vunpack.c.h.b16 %v1560
    %v1871 = vunpack.c.l.b16 %v1561
    %v1872 = vunpack.c.l.b16 %v1562
    %v1873 = vunpack.c.h.b16 %v1562
    %v1874 = vunpack.c.l.b16 %v1563
    %v1875 = vunpack.c.l.b16 %v1564
    %v1876 = vunpack.c.h.b16 %v1564
    %v1877 = vunpack.c.l.b16 %v1565
    %v1878 = vunpack.c.l.b16 %v1566
    %v1879 = vunpack.c.h.b16 %v1566
    %v1880 = vunpack.c.l.b16 %v1567
    %v1881 = vunpack.c.l.b16 %v1568
    %v1882 = vunpack.c.h.b16 %v1568
    %v1883 = vunpack.c.l.b16 %v1569
    %v1884 = vunpack.c.l.b16 %v1570
    %v1885 = vunpack.c.h.b16 %v1570
    %v1886 = vunpack.c.l.b16 %v1571
    %v1887 = vpack.c.b16 %v1701, %v1698
    %v1888 = vpack.c.b16 %v1702, %v1699
    %v1889 = vpack.c.b16 %v1703, %v1700
    %v1890 = vpack.c.b16 %v1707, %v1704
    %v1891 = vpack.c.b16 %v1708, %v1705
    %v1892 = vpack.c.b16 %v1709, %v1706
    %v1893 = vpack.c.b16 %v1713, %v1710
    %v1894 = vpack.c.b16 %v1714, %v1711
    %v1895 = vpack.c.b16 %v1715, %v1712
    %v1896 = vpack.c.b16 %v1719, %v1716
    %v1897 = vpack.c.b16 %v1720, %v1717
    %v1898 = vpack.c.b16 %v1721, %v1718
    %v1899 = vpack.c.b16 %v1725, %v1722
    %v1900 = vpack.c.b16 %v1726, %v1723
    %v1901 = vpack.c.b16 %v1727, %v1724
    %v1902 = vpack.c.b16 %v1731, %v1728
    %v1903 = vpack.c.b16 %v1732, %v1729
    %v1904 = vpack.c.b16 %v1733, %v1730
    %v1905 = vpack.c.b16 %v1737, %v1734
    %v1906 = vpack.c.b16 %v1738, %v1735
    %v1907 = vpack.c.b16 %v1739, %v1736
    %v1908 = vpack.c.b16 %v1743, %v1740
    %v1909 = vpack.c.b16 %v1744, %v1741
    %v1910 = vpack.c.b16 %v1745, %v1742
    %v1911 = vpack.c.b16 %v1749, %v1746
    %v1912 = vpack.c.b16 %v1750, %v1747
    %v1913 = vpack.c.b16 %v1751, %v1748
    %v1914 = vpack.c.b16 %v1755, %v1752
    %v1915 = vpack.c.b16 %v1756, %v1753
    %v1916 = vpack.c.b16 %v1757, %v1754
    %v1917 = vpack.c.b16 %v1761, %v1758
    %v1918 = vpack.c.b16 %v1762, %v1759
    %v1919 = vpack.c.b16 %v1763, %v1760
    %v1920 = vpack.c.b16 %v1767, %v1764
    %v1921 = vpack.c.b16 %v1768, %v1765
    %v1922 = vpack.c.b16 %v1769, %v1766
    %v1923 = vpack.c.b16 %v1773, %v1770
    %v1924 = vpack.c.b16 %v1774, %v1771
    %v1925 = vpack.c.b16 %v1775, %v1772
    %v1926 = vpack.c.b16 %v1779, %v1776
    %v1927 = vpack.c.b16 %v1780, %v1777
    %v1928 = vpack.c.b16 %v1781, %v1778
    %v1929 = vpack.c.b16 %v1785, %v1782
    %v1930 = vpack.c.b16 %v1786, %v1783
    %v1931 = vpack.c.b16 %v1787, %v1784
    %v1932 = vpack.c.b16 %v1791, %v1788
    %v1933 = vpack.c.b16 %v1792, %v1789
    %v1934 = vpack.c.b16 %v1793, %v1790
    %v1935 = vpack.c.b16 %v1797, %v1794
    %v1936 = vpack.c.b16 %v1798, %v1795
    %v1937 = vpack.c.b16 %v1799, %v1796
    %v1938 = vpack.c.b16 %v1803, %v1800
    %v1939 = vpack.c.b16 %v1804, %v1801
    %v1940 = vpack.c.b16 %v1805, %v1802
    %v1941 = vpack.c.b16 %v1809, %v1806
    %v1942 = vpack.c.b16 %v1810, %v1807
    %v1943 = vpack.c.b16 %v1811, %v1808
    %v1944 = vpack.c.b16 %v1815, %v1812
    %v1945 = vpack.c.b16 %v1816, %v1813
    %v1946 = vpack.c.b16 %v1817, %v1814
    %v1947 = vpack.c.b16 %v1821, %v1818
    %v1948 = vpack.c.b16 %v1822, %v1819
    %v1949 = vpack.c.b16 %v1823, %v1820
    %v1950 = vpack.c.b16 %v1827, %v1824
    %v1951 = vpack.c.b16 %v1828, %v1825
    %v1952 = vpack.c.b16 %v1829, %v1826
    %v1953 = vpack.c.b16 %v1833, %v1830
    %v1954 = vpack.c.b16 %v1834, %v1831
    %v1955 = vpack.c.b16 %v1835, %v1832
    %v1956 = vpack.c.b16 %v1839, %v1836
    %v1957 = vpack.c.b16 %v1840, %v1837
    %v1958 = vpack.c.b16 %v1841, %v1838
    %v1959 = vpack.c.b16 %v1845, %v1842
    %v1960 = vpack.c.b16 %v1846, %v1843
    %v1961 = vpack.c.b16 %v1847, %v1844
    %v1962 = vpack.c.b16 %v1851, %v1848
    %v1963 = vpack.c.b16 %v1852, %v1849
    %v1964 = vpack.c.b16 %v1853, %v1850
    %v1965 = vpack.c.b16 %v1857, %v1854
    %v1966 = vpack.c.b16 %v1858, %v1855
    %v1967 = vpack.c.b16 %v1859, %v1856
    %v1968 = vpack.c.b16 %v1863, %v1860
    %v1969 = vpack.c.b16 %v1864, %v1861
    %v1970 = vpack.c.b16 %v1865, %v1862
    %v1971 = vpack.c.b16 %v1869, %v1866
    %v1972 = vpack.c.b16 %v1870, %v1867
    %v1973 = vpack.c.b16 %v1871, %v1868
    %v1974 = vpack.c.b16 %v1875, %v1872
    %v1975 = vpack.c.b16 %v1876, %v1873
    %v1976 = vpack.c.b16 %v1877, %v1874
    %v1977 = vpack.c.b16 %v1881, %v1878
    %v1978 = vpack.c.b16 %v1882, %v1879
    %v1979 = vpack.c.b16 %v1883, %v1880
    %v1980 = vpack.c.b16 %v1884, %v1884
    %v1981 = vpack.c.b16 %v1885, %v1885
    %v1982 = vpack.c.b16 %v1886, %v1886
    %vm2076 = vcmask 982016
    %v2078 = vsel %vm2076, %v1445, 0
    %vm2080 = vcmask 1043456
    %v2082 = vsel %vm2080, %v1980, 0
    %v2085 = vsel %vm2080, %v1981, 0
    %v2088 = vsel %vm2080, %v1982, 0
    %2090 = vmatprep.subr.bf16.mxu0 %v1888
    %2091 = vmatpush1.bf16.msra.mxu0 %v1887
    %2092 = vmatprep.subr.bf16.mxu0 %v1891
    %2093 = vmatpush1.bf16.msra.mxu0 %v1890
    %2094 = vmatprep.subr.bf16.mxu0 %v1894
    %2095 = vmatpush1.bf16.msra.mxu0 %v1893
    %2096 = vmatprep.subr.bf16.mxu0 %v1897
    %2097 = vmatpush1.bf16.msra.mxu0 %v1896
    %2098 = vmatprep.subr.bf16.mxu0 %v1900
    %2099 = vmatpush1.bf16.msra.mxu0 %v1899
    %2100 = vmatprep.subr.bf16.mxu0 %v1903
    %2101 = vmatpush1.bf16.msra.mxu0 %v1902
    %2102 = vmatprep.subr.bf16.mxu0 %v1906
    %2103 = vmatpush1.bf16.msra.mxu0 %v1905
    %2104 = vmatprep.subr.bf16.mxu0 %v1909
    %2105 = vmatpush1.bf16.msra.mxu0 %v1908
    %2106 = vmatprep.subr.bf16.mxu0 %v1912
    %2107 = vmatpush1.bf16.msra.mxu0 %v1911
    %2108 = vmatprep.subr.bf16.mxu0 %v1915
    %2109 = vmatpush1.bf16.msra.mxu0 %v1914
    %2110 = vmatprep.subr.bf16.mxu0 %v1918
    %2111 = vmatpush1.bf16.msra.mxu0 %v1917
    %2112 = vmatprep.subr.bf16.mxu0 %v1921
    %2113 = vmatpush1.bf16.msra.mxu0 %v1920
    %2114 = vmatprep.subr.bf16.mxu0 %v1924
    %2115 = vmatpush1.bf16.msra.mxu0 %v1923
    %2116 = vmatprep.subr.bf16.mxu0 %v1927
    %2117 = vmatpush1.bf16.msra.mxu0 %v1926
    %2118 = vmatprep.subr.bf16.mxu0 %v1930
    %2119 = vmatpush1.bf16.msra.mxu0 %v1929
    %2120 = vmatprep.subr.bf16.mxu0 %v1933
    %2121 = vmatpush1.bf16.msra.mxu0 %v1932
    %2122 = vmatprep.mubr.bf16.mxu0 %v1443
    %2123 = vmatmul.mubr.bf16.gmra.mrb[0].mxu0 %v1442
    %v2124 = vpop.f32.mrb[0].mxu0
    %v2125 = vadd.f32 0.0, %v2124
    %v2126 = vpop.f32.mrb[0].mxu0
    %v2127 = vadd.f32 0.0, %v2126
    %v2128 = vpop.f32.mrb[0].mxu0
    %v2129 = vadd.f32 0.0, %v2128
    %v2130 = vpop.f32.mrb[0].mxu0
    %v2131 = vadd.f32 0.0, %v2130
    %2132 = vdwg.mxu0
    %2133 = vmatprep.subr.bf16.mxu0 %v1936
    %2134 = vmatpush1.bf16.msra.mxu0 %v1935
    %2135 = vmatprep.subr.bf16.mxu0 %v1939
    %2136 = vmatpush1.bf16.msra.mxu0 %v1938
    %2137 = vmatprep.subr.bf16.mxu0 %v1942
    %2138 = vmatpush1.bf16.msra.mxu0 %v1941
    %2139 = vmatprep.subr.bf16.mxu0 %v1945
    %2140 = vmatpush1.bf16.msra.mxu0 %v1944
    %2141 = vmatprep.subr.bf16.mxu0 %v1948
    %2142 = vmatpush1.bf16.msra.mxu0 %v1947
    %2143 = vmatprep.subr.bf16.mxu0 %v1951
    %2144 = vmatpush1.bf16.msra.mxu0 %v1950
    %2145 = vmatprep.subr.bf16.mxu0 %v1954
    %2146 = vmatpush1.bf16.msra.mxu0 %v1953
    %2147 = vmatprep.subr.bf16.mxu0 %v1957
    %2148 = vmatpush1.bf16.msra.mxu0 %v1956
    %2149 = vmatprep.subr.bf16.mxu0 %v1960
    %2150 = vmatpush1.bf16.msra.mxu0 %v1959
    %2151 = vmatprep.subr.bf16.mxu0 %v1963
    %2152 = vmatpush1.bf16.msra.mxu0 %v1962
    %2153 = vmatprep.subr.bf16.mxu0 %v1966
    %2154 = vmatpush1.bf16.msra.mxu0 %v1965
    %2155 = vmatprep.subr.bf16.mxu0 %v1969
    %2156 = vmatpush1.bf16.msra.mxu0 %v1968
    %2157 = vmatprep.subr.bf16.mxu0 %v1972
    %2158 = vmatpush1.bf16.msra.mxu0 %v1971
    %2159 = vmatprep.subr.bf16.mxu0 %v1975
    %2160 = vmatpush1.bf16.msra.mxu0 %v1974
    %2161 = vmatprep.subr.bf16.mxu0 %v1978
    %2162 = vmatpush1.bf16.msra.mxu0 %v1977
    %2163 = vmatprep.subr.bf16.mxu0 %v2085
    %2164 = vmatpush1.bf16.msra.mxu0 %v2082
    %2165 = vmatprep.mubr.bf16.mxu0 %v2078
    %2166 = vmatmul.mubr.bf16.gmra.mrb[0].mxu0 %v1444
    %v2167 = vpop.f32.mrb[0].mxu0
    %v2168 = vadd.f32 %v2125, %v2167
    %v2169 = vpop.f32.mrb[0].mxu0
    %v2170 = vadd.f32 %v2127, %v2169
    %v2171 = vpop.f32.mrb[0].mxu0
    %v2172 = vadd.f32 %v2129, %v2171
    %v2173 = vpop.f32.mrb[0].mxu0
    %v2174 = vadd.f32 %v2131, %v2173
    %2175 = vdwg.mxu0
    %2176 = vmatprep.subr.bf16.mxu0 0
    %2177 = vmatpush1.bf16.msra.mxu0 %v1889
    %2178 = vmatprep.subr.bf16.mxu0 0
    %2179 = vmatpush1.bf16.msra.mxu0 %v1892
    %2180 = vmatprep.subr.bf16.mxu0 0
    %2181 = vmatpush1.bf16.msra.mxu0 %v1895
    %2182 = vmatprep.subr.bf16.mxu0 0
    %2183 = vmatpush1.bf16.msra.mxu0 %v1898
    %2184 = vmatprep.subr.bf16.mxu0 0
    %2185 = vmatpush1.bf16.msra.mxu0 %v1901
    %2186 = vmatprep.subr.bf16.mxu0 0
    %2187 = vmatpush1.bf16.msra.mxu0 %v1904
    %2188 = vmatprep.subr.bf16.mxu0 0
    %2189 = vmatpush1.bf16.msra.mxu0 %v1907
    %2190 = vmatprep.subr.bf16.mxu0 0
    %2191 = vmatpush1.bf16.msra.mxu0 %v1910
    %2192 = vmatprep.subr.bf16.mxu0 0
    %2193 = vmatpush1.bf16.msra.mxu0 %v1913
    %2194 = vmatprep.subr.bf16.mxu0 0
    %2195 = vmatpush1.bf16.msra.mxu0 %v1916
    %2196 = vmatprep.subr.bf16.mxu0 0
    %2197 = vmatpush1.bf16.msra.mxu0 %v1919
    %2198 = vmatprep.subr.bf16.mxu0 0
    %2199 = vmatpush1.bf16.msra.mxu0 %v1922
    %2200 = vmatprep.subr.bf16.mxu0 0
    %2201 = vmatpush1.bf16.msra.mxu0 %v1925
    %2202 = vmatprep.subr.bf16.mxu0 0
    %2203 = vmatpush1.bf16.msra.mxu0 %v1928
    %2204 = vmatprep.subr.bf16.mxu0 0
    %2205 = vmatpush1.bf16.msra.mxu0 %v1931
    %2206 = vmatprep.subr.bf16.mxu0 0
    %2207 = vmatpush1.bf16.msra.mxu0 %v1934
    %2208 = vmatprep.mubr.bf16.mxu0 %v1443
    %2209 = vmatmul.mubr.bf16.gmra.mrb[0].mxu0 %v1442
    %v2210 = vpop.f32.mrb[0].mxu0
    %v2211 = vadd.f32 0.0, %v2210
    %v2212 = vpop.f32.mrb[0].mxu0
    %v2213 = vpop.f32.mrb[0].mxu0
    %v2214 = vadd.f32 0.0, %v2213
    %v2215 = vpop.f32.mrb[0].mxu0
    %2216 = vdwg.mxu0
    %2217 = vmatprep.subr.bf16.mxu0 0
    %2218 = vmatpush1.bf16.msra.mxu0 %v1937
    %2219 = vmatprep.subr.bf16.mxu0 0
    %2220 = vmatpush1.bf16.msra.mxu0 %v1940
    %2221 = vmatprep.subr.bf16.mxu0 0
    %2222 = vmatpush1.bf16.msra.mxu0 %v1943
    %2223 = vmatprep.subr.bf16.mxu0 0
    %2224 = vmatpush1.bf16.msra.mxu0 %v1946
    %2225 = vmatprep.subr.bf16.mxu0 0
    %2226 = vmatpush1.bf16.msra.mxu0 %v1949
    %2227 = vmatprep.subr.bf16.mxu0 0
    %2228 = vmatpush1.bf16.msra.mxu0 %v1952
    %2229 = vmatprep.subr.bf16.mxu0 0
    %2230 = vmatpush1.bf16.msra.mxu0 %v1955
    %2231 = vmatprep.subr.bf16.mxu0 0
    %2232 = vmatpush1.bf16.msra.mxu0 %v1958
    %2233 = vmatprep.subr.bf16.mxu0 0
    %2234 = vmatpush1.bf16.msra.mxu0 %v1961
    %2235 = vmatprep.subr.bf16.mxu0 0
    %2236 = vmatpush1.bf16.msra.mxu0 %v1964
    %2237 = vmatprep.subr.bf16.mxu0 0
    %2238 = vmatpush1.bf16.msra.mxu0 %v1967
    %2239 = vmatprep.subr.bf16.mxu0 0
    %2240 = vmatpush1.bf16.msra.mxu0 %v1970
    %2241 = vmatprep.subr.bf16.mxu0 0
    %2242 = vmatpush1.bf16.msra.mxu0 %v1973
    %2243 = vmatprep.subr.bf16.mxu0 0
    %2244 = vmatpush1.bf16.msra.mxu0 %v1976
    %2245 = vmatprep.subr.bf16.mxu0 0
    %2246 = vmatpush1.bf16.msra.mxu0 %v1979
    %2247 = vmatprep.subr.bf16.mxu0 0
    %2248 = vmatpush1.bf16.msra.mxu0 %v2088
    %2249 = vmatprep.mubr.bf16.mxu0 %v2078
    %2250 = vmatmul.mubr.bf16.gmra.mrb[0].mxu0 %v1444
    %v2251 = vpop.f32.mrb[0].mxu0
    %v2252 = vadd.f32 %v2211, %v2251
    %v2253 = vpop.f32.mrb[0].mxu0
    %v2254 = vpop.f32.mrb[0].mxu0
    %v2255 = vadd.f32 %v2214, %v2254
    %v2256 = vpop.f32.mrb[0].mxu0
    %2257 = vdwg.mxu0
    %2262 = vrot.lane.b32.xlu0 %v2168, 48
    %v2263 = vpop.permute.xlu0 %2262
    %2264 = vrot.lane.b32.xlu0 %v2170, 48
    %v2265 = vpop.permute.xlu0 %2264
    %2266 = vrot.lane.b32.xlu0 %v2172, 48
    %v2267 = vpop.permute.xlu0 %2266
    %2268 = vrot.lane.b32.xlu0 %v2174, 48
    %v2269 = vpop.permute.xlu0 %2268
    %vm2270 = vcmask 392192
    %v2271 = vsel %vm2270, %v2263, %v2265
    %v2272 = vsel %vm2270, %v2267, %v2269
    %v2275 = vmax.f32 %v2168, %v2271
    %v2276 = vmax.f32 %v2172, %v2272
    %2279 = vrot.lane.b32.xlu0 %v2252, 48
    %v2280 = vpop.permute.xlu0 %2279
    %2281 = vrot.lane.b32.xlu0 %v2255, 48
    %v2282 = vpop.permute.xlu0 %2281
    %v2283 = vsel %vm2270, %v2265, %v2280
    %v2284 = vsel %vm2270, %v2269, %v2282
    %v2287 = vmax.f32 %v2170, %v2283
    %v2288 = vmax.f32 %v2174, %v2284
    %2291 = vrot.lane.b32.xlu0 %v2287, 96
    %v2292 = vpop.permute.xlu0 %2291
    %2293 = vrot.lane.b32.xlu0 %v2288, 96
    %v2294 = vpop.permute.xlu0 %2293
    %v2297 = vmax.f32 %v2275, %v2292
    %v2298 = vmax.f32 %v2276, %v2294
    %v2299 = vld [vmem:[%s4] sm:$0x1]
    %v2301 = vlaneseq
    %v2302 = vshrl.u32 %v2301, 7
    %v2303 = vsub.s32 0, %v2302
    %v2304 = vrot.slane %v2299, %v2303
    %v2306 = vadd.f32 %v2297, %v2304
    %v2307 = vadd.f32 %v2298, %v2304
    %v2308 = vmax.f32 %v2306, 0.0
    %v2309 = vmax.f32 %v2307, 0.0
    %v2311 = vrot.slane %v2308, 1
    %2312 = vrot.lane.b32.xlu0 %v2311, 80
    %v2313 = vpop.permute.xlu0 %2312
    %v2315 = vrot.slane %v2308, 2
    %2316 = vrot.lane.b32.xlu0 %v2315, 32
    %v2317 = vpop.permute.xlu0 %2316
    %v2319 = vrot.slane %v2308, 3
    %2320 = vrot.lane.b32.xlu0 %v2319, 112
    %v2321 = vpop.permute.xlu0 %2320
    %v2323 = vrot.slane %v2308, 4
    %2324 = vrot.lane.b32.xlu0 %v2323, 64
    %v2325 = vpop.permute.xlu0 %2324
    %v2327 = vsel %vm1368, %v2308, %v2313
    %v2328 = vsel %vm67, %v2313, %v2317
    %vm2329 = vcmask 916480
    %v2330 = vsel %vm2329, %v2328, %v2321
    %v2331 = vsel %vm65, %v2321, %v2325
    %v2333 = vrot.slane %v2309, 3
    %2334 = vrot.lane.b32.xlu0 %v2333, 112
    %v2335 = vpop.permute.xlu0 %2334
    %v2337 = vrot.slane %v2309, 4
    %2338 = vrot.lane.b32.xlu0 %v2337, 64
    %v2339 = vpop.permute.xlu0 %2338
    %v2341 = vsel %vm2329, %v2328, %v2335
    %v2342 = vsel %vm65, %v2335, %v2339
    %v2346 = vrot.slane %v2327, 4
    %v2347 = vrot.slane %v2341, 4
    %v2348 = vrot.slane %v2342, 4
    %v2349 = vrot.slane %v2339, 4
    %v2354 = vsel %vm1348, %v2327, %v2346
    %v2355 = vsel %vm1348, %v2330, %v2347
    %v2356 = vsel %vm1348, %v2331, %v2348
    %v2357 = vsel %vm1348, %v2325, %v2349
    %v2358 = vpack.c.bf16 %v2354, %v2354
    %v2359 = vpack.c.bf16 %v2355, %v2355
    %v2360 = vpack.c.bf16 %v2356, %v2356
    %v2361 = vpack.c.bf16 %v2357, %v2357
    %v2362 = vld [vmem:[%s5] sm:$0xf]
    %v2363 = vld [vmem:[%s5 + $0x4] sm:$0xf]
    %v2364 = vld [vmem:[%s5 + $0x8] sm:$0xf]
    %v2365 = vld [vmem:[%s5 + $0xc] sm:$0xf]
    %v2366 = vld [vmem:[%s5 + $0x10] sm:$0xf]
    %v2367 = vld [vmem:[%s5 + $0x14] sm:$0xf]
    %v2368 = vld [vmem:[%s5 + $0x18] sm:$0xf]
    %v2369 = vld [vmem:[%s5 + $0x1c] sm:$0xf]
    %v2370 = vld [vmem:[%s5 + $0x20] sm:$0xf]
    %v2371 = vld [vmem:[%s5 + $0x24] sm:$0xf]
    %v2372 = vld [vmem:[%s5 + $0x28] sm:$0xf]
    %v2373 = vld [vmem:[%s5 + $0x2c] sm:$0xf]
    %v2374 = vld [vmem:[%s5 + $0x30] sm:$0xf]
    %v2375 = vld [vmem:[%s5 + $0x34] sm:$0xf]
    %v2376 = vld [vmem:[%s5 + $0x38] sm:$0xf]
    %v2377 = vld [vmem:[%s5 + $0x3c] sm:$0xf]
    %v2378 = vld [vmem:[%s5 + $0x40] sm:$0xf]
    %v2379 = vld [vmem:[%s5 + $0x44] sm:$0xf]
    %v2380 = vld [vmem:[%s5 + $0x48] sm:$0xf]
    %v2381 = vld [vmem:[%s5 + $0x4c] sm:$0xf]
    %v2382 = vld [vmem:[%s5 + $0x50] sm:$0xf]
    %v2383 = vld [vmem:[%s5 + $0x54] sm:$0xf]
    %v2384 = vld [vmem:[%s5 + $0x58] sm:$0xf]
    %v2385 = vld [vmem:[%s5 + $0x5c] sm:$0xf]
    %v2386 = vld [vmem:[%s5 + $0x60] sm:$0xf]
    %v2387 = vld [vmem:[%s5 + $0x64] sm:$0xf]
    %v2388 = vld [vmem:[%s5 + $0x68] sm:$0xf]
    %v2389 = vld [vmem:[%s5 + $0x6c] sm:$0xf]
    %v2390 = vld [vmem:[%s5 + $0x70] sm:$0xf]
    %v2391 = vld [vmem:[%s5 + $0x74] sm:$0xf]
    %v2392 = vld [vmem:[%s5 + $0x78] sm:$0xf]
    %v2393 = vld [vmem:[%s5 + $0x7c] sm:$0xf]
    %v2394 = vld [vmem:[%s5 + $0x80] sm:$0xf]
    %v2395 = vld [vmem:[%s5 + $0x84] sm:$0xf]
    %v2396 = vld [vmem:[%s5 + $0x88] sm:$0xf]
    %v2397 = vld [vmem:[%s5 + $0x8c] sm:$0xf]
    %v2398 = vld [vmem:[%s5 + $0x90] sm:$0xf]
    %v2399 = vld [vmem:[%s5 + $0x94] sm:$0xf]
    %v2400 = vld [vmem:[%s5 + $0x98] sm:$0xf]
    %v2401 = vld [vmem:[%s5 + $0x9c] sm:$0xf]
    %v2402 = vld [vmem:[%s5 + $0xa0] sm:$0xf]
    %v2403 = vld [vmem:[%s5 + $0xa4] sm:$0xf]
    %v2404 = vld [vmem:[%s5 + $0xa8] sm:$0xf]
    %v2405 = vld [vmem:[%s5 + $0xac] sm:$0xf]
    %v2406 = vld [vmem:[%s5 + $0xb0] sm:$0xf]
    %v2407 = vld [vmem:[%s5 + $0xb4] sm:$0xf]
    %v2408 = vld [vmem:[%s5 + $0xb8] sm:$0xf]
    %v2409 = vld [vmem:[%s5 + $0xbc] sm:$0xf]
    %v2410 = vld [vmem:[%s5 + $0xc0] sm:$0xf]
    %v2411 = vld [vmem:[%s5 + $0xc4] sm:$0xf]
    %v2412 = vld [vmem:[%s6] sm:$0x1]
    %v2414 = vlaneseq
    %v2415 = vshrl.u32 %v2414, 7
    %v2416 = vsub.s32 0, %v2415
    %v2417 = vrot.slane %v2412, %v2416
    %v2469 = vunpack.c.l.b16 %v2362
    %v2470 = vunpack.c.l.b16 %v2363
    %v2471 = vunpack.c.l.b16 %v2364
    %v2472 = vunpack.c.l.b16 %v2365
    %v2473 = vunpack.c.l.b16 %v2366
    %v2474 = vunpack.c.l.b16 %v2367
    %v2475 = vunpack.c.l.b16 %v2368
    %v2476 = vunpack.c.l.b16 %v2369
    %v2477 = vunpack.c.l.b16 %v2370
    %v2478 = vunpack.c.l.b16 %v2371
    %v2479 = vunpack.c.l.b16 %v2372
    %v2480 = vunpack.c.l.b16 %v2373
    %v2481 = vunpack.c.l.b16 %v2374
    %v2482 = vunpack.c.l.b16 %v2375
    %v2483 = vunpack.c.l.b16 %v2376
    %v2484 = vunpack.c.l.b16 %v2377
    %v2485 = vunpack.c.l.b16 %v2378
    %v2486 = vunpack.c.l.b16 %v2379
    %v2487 = vunpack.c.l.b16 %v2380
    %v2488 = vunpack.c.l.b16 %v2381
    %v2489 = vunpack.c.l.b16 %v2382
    %v2490 = vunpack.c.l.b16 %v2383
    %v2491 = vunpack.c.l.b16 %v2384
    %v2492 = vunpack.c.l.b16 %v2385
    %v2493 = vunpack.c.l.b16 %v2386
    %v2494 = vunpack.c.l.b16 %v2387
    %v2495 = vunpack.c.l.b16 %v2388
    %v2496 = vunpack.c.l.b16 %v2389
    %v2497 = vunpack.c.l.b16 %v2390
    %v2498 = vunpack.c.l.b16 %v2391
    %v2499 = vunpack.c.l.b16 %v2392
    %v2500 = vunpack.c.l.b16 %v2393
    %v2501 = vunpack.c.l.b16 %v2394
    %v2502 = vunpack.c.l.b16 %v2395
    %v2503 = vunpack.c.l.b16 %v2396
    %v2504 = vunpack.c.l.b16 %v2397
    %v2505 = vunpack.c.l.b16 %v2398
    %v2506 = vunpack.c.l.b16 %v2399
    %v2507 = vunpack.c.l.b16 %v2400
    %v2508 = vunpack.c.l.b16 %v2401
    %v2509 = vunpack.c.l.b16 %v2402
    %v2510 = vunpack.c.l.b16 %v2403
    %v2511 = vunpack.c.l.b16 %v2404
    %v2512 = vunpack.c.l.b16 %v2405
    %v2513 = vunpack.c.l.b16 %v2406
    %v2514 = vunpack.c.l.b16 %v2407
    %v2515 = vunpack.c.l.b16 %v2408
    %v2516 = vunpack.c.l.b16 %v2409
    %v2517 = vunpack.c.l.b16 %v2410
    %v2518 = vunpack.c.l.b16 %v2411
    %v2519 = vpack.c.b16 %v2470, %v2469
    %v2520 = vpack.c.b16 %v2472, %v2471
    %v2521 = vpack.c.b16 %v2474, %v2473
    %v2522 = vpack.c.b16 %v2476, %v2475
    %v2523 = vpack.c.b16 %v2478, %v2477
    %v2524 = vpack.c.b16 %v2480, %v2479
    %v2525 = vpack.c.b16 %v2482, %v2481
    %v2526 = vpack.c.b16 %v2484, %v2483
    %v2527 = vpack.c.b16 %v2486, %v2485
    %v2528 = vpack.c.b16 %v2488, %v2487
    %v2529 = vpack.c.b16 %v2490, %v2489
    %v2530 = vpack.c.b16 %v2492, %v2491
    %v2531 = vpack.c.b16 %v2494, %v2493
    %v2532 = vpack.c.b16 %v2496, %v2495
    %v2533 = vpack.c.b16 %v2498, %v2497
    %v2534 = vpack.c.b16 %v2500, %v2499
    %v2535 = vpack.c.b16 %v2502, %v2501
    %v2536 = vpack.c.b16 %v2504, %v2503
    %v2537 = vpack.c.b16 %v2506, %v2505
    %v2538 = vpack.c.b16 %v2508, %v2507
    %v2539 = vpack.c.b16 %v2510, %v2509
    %v2540 = vpack.c.b16 %v2512, %v2511
    %v2541 = vpack.c.b16 %v2514, %v2513
    %v2542 = vpack.c.b16 %v2516, %v2515
    %v2543 = vpack.c.b16 %v2518, %v2517
    %vm2569 = vcmask 130048
    %v2571 = vsel %vm2569, %v2361, 0
    %2573 = vmatprep.subr.bf16.mxu0 0
    %2574 = vmatpush1.bf16.msra.mxu0 %v2519
    %2575 = vmatprep.subr.bf16.mxu0 0
    %2576 = vmatpush1.bf16.msra.mxu0 %v2520
    %2577 = vmatprep.subr.bf16.mxu0 0
    %2578 = vmatpush1.bf16.msra.mxu0 %v2521
    %2579 = vmatprep.subr.bf16.mxu0 0
    %2580 = vmatpush1.bf16.msra.mxu0 %v2522
    %2581 = vmatprep.subr.bf16.mxu0 0
    %2582 = vmatpush1.bf16.msra.mxu0 %v2523
    %2583 = vmatprep.subr.bf16.mxu0 0
    %2584 = vmatpush1.bf16.msra.mxu0 %v2524
    %2585 = vmatprep.subr.bf16.mxu0 0
    %2586 = vmatpush1.bf16.msra.mxu0 %v2525
    %2587 = vmatprep.subr.bf16.mxu0 0
    %2588 = vmatpush1.bf16.msra.mxu0 %v2526
    %2589 = vmatprep.subr.bf16.mxu0 0
    %2590 = vmatpush1.bf16.msra.mxu0 %v2527
    %2591 = vmatprep.subr.bf16.mxu0 0
    %2592 = vmatpush1.bf16.msra.mxu0 %v2528
    %2593 = vmatprep.subr.bf16.mxu0 0
    %2594 = vmatpush1.bf16.msra.mxu0 %v2529
    %2595 = vmatprep.subr.bf16.mxu0 0
    %2596 = vmatpush1.bf16.msra.mxu0 %v2530
    %2597 = vmatprep.subr.bf16.mxu0 0
    %2598 = vmatpush1.bf16.msra.mxu0 %v2531
    %2599 = vmatprep.subr.bf16.mxu0 0
    %2600 = vmatpush1.bf16.msra.mxu0 %v2532
    %2601 = vmatprep.subr.bf16.mxu0 0
    %2602 = vmatpush1.bf16.msra.mxu0 %v2533
    %2603 = vmatprep.subr.bf16.mxu0 0
    %2604 = vmatpush1.bf16.msra.mxu0 %v2534
    %2605 = vmatprep.mubr.bf16.mxu0 %v2359
    %2606 = vmatmul.mubr.bf16.gmra.mrb[0].mxu0 %v2358
    %v2607 = vpop.f32.mrb[0].mxu0
    %v2608 = vadd.f32 %v2417, %v2607
    %v2609 = vpop.f32.mrb[0].mxu0
    %v2610 = vpop.f32.mrb[0].mxu0
    %v2611 = vpop.f32.mrb[0].mxu0
    %2612 = vdwg.mxu0
    %2613 = vmatprep.subr.bf16.mxu0 0
    %2614 = vmatpush1.bf16.msra.mxu0 %v2535
    %2615 = vmatprep.subr.bf16.mxu0 0
    %2616 = vmatpush1.bf16.msra.mxu0 %v2536
    %2617 = vmatprep.subr.bf16.mxu0 0
    %2618 = vmatpush1.bf16.msra.mxu0 %v2537
    %2619 = vmatprep.subr.bf16.mxu0 0
    %2620 = vmatpush1.bf16.msra.mxu0 %v2538
    %2621 = vmatprep.subr.bf16.mxu0 0
    %2622 = vmatpush1.bf16.msra.mxu0 %v2539
    %2623 = vmatprep.subr.bf16.mxu0 0
    %2624 = vmatpush1.bf16.msra.mxu0 %v2540
    %2625 = vmatprep.subr.bf16.mxu0 0
    %2626 = vmatpush1.bf16.msra.mxu0 %v2541
    %2627 = vmatprep.subr.bf16.mxu0 0
    %2628 = vmatpush1.bf16.msra.mxu0 %v2542
    %2629 = vmatprep.subr.bf16.mxu0 0
    %2630 = vmatpush1.bf16.msra.mxu0 %v2543
    %2631 = vmatprep.subr.bf16.mxu0 0
    %2632 = vmatpush1.bf16.msra.mxu0 0
    %2633 = vmatprep.subr.bf16.mxu0 0
    %2634 = vmatpush1.bf16.msra.mxu0 0
    %2635 = vmatprep.subr.bf16.mxu0 0
    %2636 = vmatpush1.bf16.msra.mxu0 0
    %2637 = vmatprep.subr.bf16.mxu0 0
    %2638 = vmatpush1.bf16.msra.mxu0 0
    %2639 = vmatprep.subr.bf16.mxu0 0
    %2640 = vmatpush1.bf16.msra.mxu0 0
    %2641 = vmatprep.subr.bf16.mxu0 0
    %2642 = vmatpush1.bf16.msra.mxu0 0
    %2643 = vmatprep.subr.bf16.mxu0 0
    %2644 = vmatpush1.bf16.msra.mxu0 0
    %2645 = vmatprep.mubr.bf16.mxu0 %v2571
    %2646 = vmatmul.mubr.bf16.gmra.mrb[0].mxu0 %v2360
    %v2647 = vpop.f32.mrb[0].mxu0
    %v2648 = vadd.f32 %v2608, %v2647
    %v2649 = vpop.f32.mrb[0].mxu0
    %v2650 = vpop.f32.mrb[0].mxu0
    %v2651 = vpop.f32.mrb[0].mxu0
    %2652 = vdwg.mxu0
    %v2653 = vmax.f32 %v2648, 0.0
    %v2654 = vpack.c.bf16 %v2653, %v2653
    %v2655 = vld [vmem:[%s7] sm:$0xf]
    %v2656 = vld [vmem:[%s7 + $0x4] sm:$0xf]
    %v2657 = vld [vmem:[%s7 + $0x8] sm:$0xf]
    %v2658 = vld [vmem:[%s7 + $0xc] sm:$0xf]
    %v2659 = vld [vmem:[%s7 + $0x10] sm:$0xf]
    %v2660 = vld [vmem:[%s7 + $0x14] sm:$0xf]
    %v2661 = vld [vmem:[%s7 + $0x18] sm:$0xf]
    %v2662 = vld [vmem:[%s7 + $0x1c] sm:$0xf]
    %v2663 = vld [vmem:[%s7 + $0x20] sm:$0xf]
    %v2664 = vld [vmem:[%s7 + $0x24] sm:$0xf]
    %v2665 = vld [vmem:[%s7 + $0x28] sm:$0xf]
    %v2666 = vld [vmem:[%s7 + $0x2c] sm:$0xf]
    %v2667 = vld [vmem:[%s7 + $0x30] sm:$0xf]
    %v2668 = vld [vmem:[%s7 + $0x34] sm:$0xf]
    %v2669 = vld [vmem:[%s7 + $0x38] sm:$0xf]
    %v2670 = vld [vmem:[%s7 + $0x3c] sm:$0xf]
    %v2671 = vld [vmem:[%s8] sm:$0x1]
    %v2673 = vlaneseq
    %v2674 = vshrl.u32 %v2673, 7
    %v2675 = vsub.s32 0, %v2674
    %v2676 = vrot.slane %v2671, %v2675
    %v2694 = vunpack.c.l.b16 %v2655
    %v2695 = vunpack.c.l.b16 %v2656
    %v2696 = vunpack.c.l.b16 %v2657
    %v2697 = vunpack.c.l.b16 %v2658
    %v2698 = vunpack.c.l.b16 %v2659
    %v2699 = vunpack.c.l.b16 %v2660
    %v2700 = vunpack.c.l.b16 %v2661
    %v2701 = vunpack.c.l.b16 %v2662
    %v2702 = vunpack.c.l.b16 %v2663
    %v2703 = vunpack.c.l.b16 %v2664
    %v2704 = vunpack.c.l.b16 %v2665
    %v2705 = vunpack.c.l.b16 %v2666
    %v2706 = vunpack.c.l.b16 %v2667
    %v2707 = vunpack.c.l.b16 %v2668
    %v2708 = vunpack.c.l.b16 %v2669
    %v2709 = vunpack.c.l.b16 %v2670
    %v2710 = vpack.c.b16 %v2695, %v2694
    %v2711 = vpack.c.b16 %v2697, %v2696
    %v2712 = vpack.c.b16 %v2699, %v2698
    %v2713 = vpack.c.b16 %v2701, %v2700
    %v2714 = vpack.c.b16 %v2703, %v2702
    %v2715 = vpack.c.b16 %v2705, %v2704
    %v2716 = vpack.c.b16 %v2707, %v2706
    %v2717 = vpack.c.b16 %v2709, %v2708
    %2726 = vmatprep.subr.bf16.mxu0 0
    %2727 = vmatpush1.bf16.msra.mxu0 %v2710
    %2728 = vmatprep.subr.bf16.mxu0 0
    %2729 = vmatpush1.bf16.msra.mxu0 %v2711
    %2730 = vmatprep.subr.bf16.mxu0 0
    %2731 = vmatpush1.bf16.msra.mxu0 %v2712
    %2732 = vmatprep.subr.bf16.mxu0 0
    %2733 = vmatpush1.bf16.msra.mxu0 %v2713
    %2734 = vmatprep.subr.bf16.mxu0 0
    %2735 = vmatpush1.bf16.msra.mxu0 %v2714
    %2736 = vmatprep.subr.bf16.mxu0 0
    %2737 = vmatpush1.bf16.msra.mxu0 %v2715
    %2738 = vmatprep.subr.bf16.mxu0 0
    %2739 = vmatpush1.bf16.msra.mxu0 %v2716
    %2740 = vmatprep.subr.bf16.mxu0 0
    %2741 = vmatpush1.bf16.msra.mxu0 %v2717
    %2742 = vmatprep.subr.bf16.mxu0 0
    %2743 = vmatpush1.bf16.msra.mxu0 0
    %2744 = vmatprep.subr.bf16.mxu0 0
    %2745 = vmatpush1.bf16.msra.mxu0 0
    %2746 = vmatprep.subr.bf16.mxu0 0
    %2747 = vmatpush1.bf16.msra.mxu0 0
    %2748 = vmatprep.subr.bf16.mxu0 0
    %2749 = vmatpush1.bf16.msra.mxu0 0
    %2750 = vmatprep.subr.bf16.mxu0 0
    %2751 = vmatpush1.bf16.msra.mxu0 0
    %2752 = vmatprep.subr.bf16.mxu0 0
    %2753 = vmatpush1.bf16.msra.mxu0 0
    %2754 = vmatprep.subr.bf16.mxu0 0
    %2755 = vmatpush1.bf16.msra.mxu0 0
    %2756 = vmatprep.subr.bf16.mxu0 0
    %2757 = vmatpush1.bf16.msra.mxu0 0
    %2758 = vmatprep.mubr.bf16.mxu0 0
    %2759 = vmatmul.mubr.bf16.gmra.mrb[0].mxu0 %v2654
    %v2760 = vpop.f32.mrb[0].mxu0
    %v2761 = vadd.f32 %v2676, %v2760
    %v2762 = vpop.f32.mrb[0].mxu0
    %v2763 = vpop.f32.mrb[0].mxu0
    %v2764 = vpop.f32.mrb[0].mxu0
    %2765 = vdwg.mxu0
    %v2766 = vmax.f32 %v2761, 0.0
    %v2767 = vpack.c.bf16 %v2766, %v2766
    %v2768 = vld [vmem:[%s9] sm:$0xf]
    %v2769 = vld [vmem:[%s9 + $0x4] sm:$0xf]
    %v2770 = vld [vmem:[%s9 + $0x8] sm:$0xf]
    %v2771 = vld [vmem:[%s9 + $0xc] sm:$0xf]
    %v2772 = vld [vmem:[%s9 + $0x10] sm:$0xf]
    %v2773 = vld [vmem:[%s9 + $0x14] sm:$0xf]
    %v2774 = vld [vmem:[%s9 + $0x18] sm:$0xf]
    %v2775 = vld [vmem:[%s9 + $0x1c] sm:$0xf]
    %v2776 = vld [vmem:[%s9 + $0x20] sm:$0xf]
    %v2777 = vld [vmem:[%s9 + $0x24] sm:$0xf]
    %v2778 = vld [vmem:[%s9 + $0x28] sm:$0x3]
    %v2779 = vld [vmem:[%s10] sm:$0x1]
    %v2781 = vlaneseq
    %v2782 = vshrl.u32 %v2781, 7
    %v2783 = vsub.s32 0, %v2782
    %v2784 = vrot.slane %v2779, %v2783
    %v2797 = vunpack.c.l.b16 %v2768
    %v2798 = vunpack.c.l.b16 %v2769
    %v2799 = vunpack.c.l.b16 %v2770
    %v2800 = vunpack.c.l.b16 %v2771
    %v2801 = vunpack.c.l.b16 %v2772
    %v2802 = vunpack.c.l.b16 %v2773
    %v2803 = vunpack.c.l.b16 %v2774
    %v2804 = vunpack.c.l.b16 %v2775
    %v2805 = vunpack.c.l.b16 %v2776
    %v2806 = vunpack.c.l.b16 %v2777
    %v2807 = vunpack.c.l.b16 %v2778
    %v2808 = vpack.c.b16 %v2798, %v2797
    %v2809 = vpack.c.b16 %v2800, %v2799
    %v2810 = vpack.c.b16 %v2802, %v2801
    %v2811 = vpack.c.b16 %v2804, %v2803
    %v2812 = vpack.c.b16 %v2806, %v2805
    %v2813 = vpack.c.b16 %v2807, %v2807
    %v2820 = vsel %vm1362, %v2767, 0
    %v2823 = vsel %vm1336, %v2813, 0
    %2825 = vmatprep.subr.bf16.mxu0 0
    %2826 = vmatpush1.bf16.msra.mxu0 %v2808
    %2827 = vmatprep.subr.bf16.mxu0 0
    %2828 = vmatpush1.bf16.msra.mxu0 %v2809
    %2829 = vmatprep.subr.bf16.mxu0 0
    %2830 = vmatpush1.bf16.msra.mxu0 %v2810
    %2831 = vmatprep.subr.bf16.mxu0 0
    %2832 = vmatpush1.bf16.msra.mxu0 %v2811
    %2833 = vmatprep.subr.bf16.mxu0 0
    %2834 = vmatpush1.bf16.msra.mxu0 %v2812
    %2835 = vmatprep.subr.bf16.mxu0 0
    %2836 = vmatpush1.bf16.msra.mxu0 %v2823
    %2837 = vmatprep.subr.bf16.mxu0 0
    %2838 = vmatpush1.bf16.msra.mxu0 0
    %2839 = vmatprep.subr.bf16.mxu0 0
    %2840 = vmatpush1.bf16.msra.mxu0 0
    %2841 = vmatprep.subr.bf16.mxu0 0
    %2842 = vmatpush1.bf16.msra.mxu0 0
    %2843 = vmatprep.subr.bf16.mxu0 0
    %2844 = vmatpush1.bf16.msra.mxu0 0
    %2845 = vmatprep.subr.bf16.mxu0 0
    %2846 = vmatpush1.bf16.msra.mxu0 0
    %2847 = vmatprep.subr.bf16.mxu0 0
    %2848 = vmatpush1.bf16.msra.mxu0 0
    %2849 = vmatprep.subr.bf16.mxu0 0
    %2850 = vmatpush1.bf16.msra.mxu0 0
    %2851 = vmatprep.subr.bf16.mxu0 0
    %2852 = vmatpush1.bf16.msra.mxu0 0
    %2853 = vmatprep.subr.bf16.mxu0 0
    %2854 = vmatpush1.bf16.msra.mxu0 0
    %2855 = vmatprep.subr.bf16.mxu0 0
    %2856 = vmatpush1.bf16.msra.mxu0 0
    %2857 = vmatprep.mubr.bf16.mxu0 0
    %2858 = vmatmul.mubr.bf16.gmra.mrb[0].mxu0 %v2820
    %v2859 = vpop.f32.mrb[0].mxu0
    %v2860 = vadd.f32 %v2784, %v2859
    %v2861 = vpop.f32.mrb[0].mxu0
    %v2862 = vpop.f32.mrb[0].mxu0
    %v2863 = vpop.f32.mrb[0].mxu0
    %2864 = vdwg.mxu0
    %2865 = vst [vmem:[#allocation2] sm:$0x3] %v2860
    // Predicated region
    $region46: #{forward.1} parent=1 // pred_check
      _
    $region47: #{forward.1} parent=1 // pred_check_branch
      %2867 = sbr.rel (0) target = $region49
    $region48: #{forward.1} parent=1 // pred_region
      %s2869 = ssub.s32 32, 32
      %2870 = vsyncadd [#allocation3], %s2869
      %s2872 = sshll.u32 [#allocation2], 4
      %s2873 = int_to_ptr.vmem [resolvable:$true] %s2872
      %2875 = dma.vmem_to_hbm [thread:$0]  %s2873, 32, %s11, [#allocation3]
    $region49: #{forward.1} parent=1 // pred_fallthru
      _
    // Predicated region
    $region50: #{forward.1} parent=1 // pred_check
      _
    $region51: #{forward.1} parent=1 // pred_check_branch
      %2877 = sbr.rel (0) target = $region53
    $region52: #{forward.1} parent=1 // pred_region
      %2878 = dma.done [#allocation3], 32
    $region53: #{forward.1} parent=1 // pred_fallthru
      _
    %2879 = vsyncpa [#allocation3], 1

</llo_original>
